<compile_context>
chip_gen: v5e
topology: v5e:2x2
jax: 0.10.0
libtpu: 0.0.40
codegen_flags: <defaults>
</compile_context>

<pallas_src>
import functools
import math

import jax
import jax.numpy as jnp
from jax import lax
from jax.experimental import pallas as pl
from jax.experimental.pallas import tpu as pltpu


def _round_up(x, m):
    return (x + m - 1) // m * m


# --------------------------------------------------------------------------- #
# Kernel
# --------------------------------------------------------------------------- #
def _conv2_kernel(x_ref, w_ref, s_ref, b_ref, o_ref, *,
                  tap_offsets, chunk, n_inner, pitch):
    # x_ref: (Min, Kin)        bf16  one row-tile of the pitched image (+ halo rows)
    # w_ref: (n_taps, Kin, tn) bf16  raw conv weights (BN scale NOT folded in)
    # s_ref: (1, tn)           f32   BN scale  (gamma / sqrt(var + eps))
    # b_ref: (1, tn)           f32   BN bias   (beta - mean * scale)
    # o_ref: (Mout, tn)              Mout = n_inner * chunk
    scale = s_ref[...]
    bias = b_ref[...]

    def compute_chunk(base):
        acc = None
        for t, off in enumerate(tap_offsets):          # 3 (dw-folded) or 9 taps
            start = base + off
            if not isinstance(start, int) and off % pitch == 0:
                start = pl.multiple_of(start, pitch)   # sublane-aligned LHS start
            lhs = x_ref[pl.ds(start, chunk), :]        # contiguous (chunk, Kin)
            part = jnp.dot(lhs, w_ref[t], preferred_element_type=jnp.float32)
            acc = part if acc is None else acc + part
        y = acc * scale + bias                         # BN epilogue in f32
        sig = pl.reciprocal(1.0 + jnp.exp(-y), approx=True)   # sigmoid on the EUP
        o_ref[pl.ds(base, chunk), :] = (y * sig).astype(o_ref.dtype)   # SiLU

    if n_inner <= 8:                                   # short: fully unrolled
        for c in range(n_inner):
            compute_chunk(c * chunk)
    else:                                              # long: keep code size bounded
        def body(c, carry):
            compute_chunk(pl.multiple_of(c * chunk, chunk))
            return carry
        lax.fori_loop(0, n_inner, body, 0)


# --------------------------------------------------------------------------- #
# One-time parameter folding (call once per model, reuse every forward)
# --------------------------------------------------------------------------- #
def fold_conv2_params(w3, w1, bn_gamma, bn_beta, bn_mean, bn_var, *, eps=1e-5):
    C2, C1, kH, kW = w3.shape
    assert (kH, kW) == (3, 3) and w1.shape == (C2, C1, 1, 1)
    # fold the 1x1 branch exactly into the centre tap of the 3x3 kernel
    w_eff = w3.astype(jnp.float32).at[:, :, 1, 1].add(w1[:, :, 0, 0].astype(jnp.float32))
    scale = (bn_gamma / jnp.sqrt(bn_var + eps)).astype(jnp.float32)   # (C2,)
    bias = (bn_beta - bn_mean * scale).astype(jnp.float32)            # (C2,)

    Np = _round_up(C2, 128)                 # lane-dense output channels
    fold_dw = C1 < 128                      # fold dw taps into K when C1 is small
    w_t = jnp.transpose(w_eff, (2, 3, 1, 0))                 # (dh, dw, c, o)
    if fold_dw:
        w_k = w_t.reshape(3, 3 * C1, C2)                     # (dh, dw*C1+c, o)
    else:
        w_k = w_t.reshape(9, C1, C2)                         # (dh*3+dw, c, o)
    w_k = jnp.pad(w_k, ((0, 0), (0, 0), (0, Np - C2))).astype(jnp.bfloat16)
    scale_k = jnp.pad(scale, (0, Np - C2)).reshape(1, Np)
    bias_k = jnp.pad(bias, (0, Np - C2)).reshape(1, Np)
    return dict(w_k=w_k, scale_k=scale_k, bias_k=bias_k,
                c1=C1, c2=C2, np_=Np, fold_dw=fold_dw)


# --------------------------------------------------------------------------- #
# Generation-aware tiling
# --------------------------------------------------------------------------- #
def _tpu_budget():
    """Return (vmem_budget_bytes, preferred_tn) for the local TPU generation."""
    phys = 64 * 2 ** 20                     # conservative default: v7x physical VMEM
    prefer_tn = 256
    try:
        phys = int(pltpu.get_tpu_info().vmem_capacity_bytes)
    except Exception:
        pass
    try:
        kind = jax.devices()[0].device_kind.lower()
        if "v5 lite" in kind or "v5e" in kind or "v5litepod" in kind:
            prefer_tn = 128                 # v5e MXU is 4x128^2: tn=256 only costs VMEM
    except Exception:
        pass
    return int(phys * 3 // 4), prefer_tn    # ~75% of physical as the soft budget


def _choose_tiles(H, Wp, Kin, n_taps, out_bytes, Np, halo, budget, prefer_tn):
    """Pick (tn, TM rows per grid step, mr rows per in-kernel chunk)."""
    kin_lane = _round_up(Kin, 128)          # VMEM lane padding of the LHS block
    kin_sub = _round_up(Kin, 16)

    def est(tm, tn):                        # double-buffered block footprint
        xb = (tm + halo) * Wp * kin_lane * 2
        wb = n_taps * kin_sub * tn * 2
        ob = tm * Wp * tn * out_bytes
        sb = 2 * 16 * tn * 4
        return 2 * (xb + wb + ob + sb) + (2 << 20)

    tn_opts = [t for t in ((256, 128) if prefer_tn == 256 else (128,)) if Np % t == 0]
    if not tn_opts:
        tn_opts = [128]
    fallback = None
    for tn in tn_opts:                      # drop tn before shrinking rows too far
        mr = max(1, (32768 // tn) // Wp)    # keep the f32 accumulator ~<= 128 KiB
        tm = mr * max(1, math.ceil(min(H, 64) / mr))
        while tm > mr and est(tm, tn) > budget:
            tm -= mr
        if est(tm, tn) <= budget:
            return tn, tm, mr
        fallback = (tn, mr, mr)
    return fallback                          # smallest tile; vmem_limit absorbs it


# --------------------------------------------------------------------------- #
# Forward wrapper
# --------------------------------------------------------------------------- #
def conv2_bn_silu(x_nchw, w3, w1, bn_gamma, bn_beta, bn_mean, bn_var, *,
                  eps=1e-5, out_dtype=None, folded=None):
    """Fused Conv2 forward: SiLU(BN(conv3x3(x) + conv1x1(x))), NCHW in/out."""
    B, C1, H, W = x_nchw.shape
    if folded is None:
        folded = fold_conv2_params(w3, w1, bn_gamma, bn_beta, bn_mean, bn_var, eps=eps)
    assert folded["c1"] == C1
    C2, Np, fold_dw = folded["c2"], folded["np_"], folded["fold_dw"]
    out_dtype = x_nchw.dtype if out_dtype is None else out_dtype
    out_bytes = jnp.dtype(out_dtype).itemsize

    # ---- layout parameters ---------------------------------------------------
    Wp = _round_up(W + 2, 16)               # sublane-aligned width pitch for bf16
    if fold_dw:
        Kin, n_taps, halo = 3 * C1, 3, 2
        tap_offsets = (0, Wp, 2 * Wp)       # all multiples of the pitch: aligned
    else:
        Kin, n_taps, halo = C1, 9, 3        # dw offsets +1/+2 only hit junk columns
        tap_offsets = tuple(dh * Wp + dw for dh in range(3) for dw in range(3))

    budget, prefer_tn = _tpu_budget()
    tn, TM, mr = _choose_tiles(H, Wp, Kin, n_taps, out_bytes, Np, halo, budget, prefer_tn)
    n_tiles = math.ceil(H / TM)
    n_inner = TM // mr
    chunk = mr * Wp
    Min = (TM + halo) * Wp
    Mout = TM * Wp
    G = B * n_tiles

    # ---- activation prep: NHWC (bf16), pad, dw-fold, row-tile with halo -------
    x_nhwc = jnp.transpose(x_nchw, (0, 2, 3, 1)).astype(jnp.bfloat16)
    w_total = Wp + 2 if fold_dw else Wp
    rows_total = n_tiles * TM + halo
    x_pad = jnp.pad(x_nhwc, ((0, 0), (1, rows_total - 1 - H),
                             (1, w_total - 1 - W), (0, 0)))
    if fold_dw:
        # fold the 3 dw taps into the contraction dim: K = 3*C1
        x_cat = jnp.concatenate([x_pad[:, :, d:d + Wp, :] for d in range(3)], axis=-1)
    else:
        x_cat = x_pad
    # row tiles with `halo` duplicated rows -> plain Blocked BlockSpecs, no overlap
    row_idx = jnp.arange(n_tiles)[:, None] * TM + jnp.arange(TM + halo)[None, :]
    x_tiles = x_cat[:, row_idx].reshape(G, Min, Kin)

    # ---- VMEM limit: generation aware, raised only when the blocks need it ----
    blk = (Min * _round_up(Kin, 128) * 2 + n_taps * _round_up(Kin, 16) * tn * 2
           + Mout * tn * out_bytes + 2 * 16 * tn * 4)
    vmem_need = 2 * blk + (2 << 20)
    cp = dict(dimension_semantics=("parallel", "parallel"))
    if vmem_need > 24 * 2 ** 20:
        cp["vmem_limit_bytes"] = int(max(min(vmem_need * 5 // 4, budget), vmem_need))

    kernel = functools.partial(_conv2_kernel, tap_offsets=tap_offsets,
                               chunk=chunk, n_inner=n_inner, pitch=Wp)
    out_tiles = pl.pallas_call(
        kernel,
        out_shape=jax.ShapeDtypeStruct((G, Mout, Np), out_dtype),
        grid=(G, Np // tn),
        in_specs=[
            pl.BlockSpec((None, Min, Kin), lambda g, j: (g, 0, 0)),
            pl.BlockSpec((n_taps, Kin, tn), lambda g, j: (0, 0, j)),
            pl.BlockSpec((1, tn), lambda g, j: (0, j)),
            pl.BlockSpec((1, tn), lambda g, j: (0, j)),
        ],
        out_specs=pl.BlockSpec((None, Mout, tn), lambda g, j: (g, 0, j)),
        compiler_params=pltpu.CompilerParams(**cp),
    )(x_tiles, folded["w_k"], folded["scale_k"], folded["bias_k"])

    # ---- strip pitch / row / channel padding, back to NCHW --------------------
    y = out_tiles.reshape(B, n_tiles, TM, Wp, Np)[:, :, :, :W, :C2]
    y = y.reshape(B, n_tiles * TM, W, C2)[:, :H]
    return jnp.transpose(y, (0, 3, 1, 2))


# --------------------------------------------------------------------------- #
# Pure-JAX reference and self-test
# --------------------------------------------------------------------------- #
def _reference(x, w3, w1, gamma, beta, mean, var, eps=1e-5):
    """Reference of Conv2.forward: SiLU(BN(conv3x3(x) + conv1x1(x)))."""
    dn = ("NCHW", "OIHW", "NCHW")
    y = (jax.lax.conv_general_dilated(x, w3, (1, 1), ((1, 1), (1, 1)),
                                      dimension_numbers=dn)
         + jax.lax.conv_general_dilated(x, w1, (1, 1), ((0, 0), (0, 0)),
                                        dimension_numbers=dn))
    inv = 1.0 / jnp.sqrt(var + eps)
    y = (y - mean[None, :, None, None]) * (gamma * inv)[None, :, None, None] \
        + beta[None, :, None, None]
    return y * jax.nn.sigmoid(y)


if __name__ == "__main__":
    key = jax.random.PRNGKey(0)
    k_x, k_w3, k_w1, k_g, k_b, k_m, k_v = jax.random.split(key, 7)

    B, C1, C2, H, W = 2, 4, 8, 16, 16

    x = jax.random.normal(k_x, (B, C1, H, W), dtype=jnp.float32)
    w3 = 0.1 * jax.random.normal(k_w3, (C2, C1, 3, 3), dtype=jnp.float32)
    w1 = 0.1 * jax.random.normal(k_w1, (C2, C1, 1, 1), dtype=jnp.float32)
    bn_gamma = 1.0 + 0.1 * jax.random.normal(k_g, (C2,), dtype=jnp.float32)
    bn_beta = 0.1 * jax.random.normal(k_b, (C2,), dtype=jnp.float32)
    bn_mean = 0.1 * jax.random.normal(k_m, (C2,), dtype=jnp.float32)
    bn_var = jnp.abs(1.0 + 0.1 * jax.random.normal(k_v, (C2,), dtype=jnp.float32))

    folded = fold_conv2_params(w3, w1, bn_gamma, bn_beta, bn_mean, bn_var)
    out = conv2_bn_silu(x, w3, w1, bn_gamma, bn_beta, bn_mean, bn_var, folded=folded)
    out = jax.block_until_ready(out)

    ref = _reference(x, w3, w1, bn_gamma, bn_beta, bn_mean, bn_var)
    assert out.shape == (B, C2, H, W), out.shape
    err = float(jnp.max(jnp.abs(out - ref)))
    assert err < 5e-2, err   # bf16 MXU operands + approx sigmoid vs f32 reference
    print("KERNEL_OK")
</pallas_src>

<mosaic_0001>
module attributes {stable_mosaic.version = 11 : i64} {
  func.func @_conv2_kernel(%arg0: i32, %arg1: i32, %arg2: memref<1x576x12xbf16, #tpu.memory_space<vmem>>, %arg3: memref<3x12x128xbf16, #tpu.memory_space<vmem>>, %arg4: memref<1x128xf32, #tpu.memory_space<vmem>>, %arg5: memref<1x128xf32, #tpu.memory_space<vmem>>, %arg6: memref<1x512x128xf32, #tpu.memory_space<vmem>>) attributes {dimension_semantics = [#tpu.dimension_semantics<parallel>, #tpu.dimension_semantics<parallel>], iteration_bounds = array<i64: 2, 1>, scalar_prefetch = 0 : i64, scratch_operands = 0 : i64, tpu.core_type = #tpu.core_type<tc>, window_params = [{transform_indices = @transform_0, window_bounds = array<i64: 1, 576, 12>}, {transform_indices = @transform_1, window_bounds = array<i64: 3, 12, 128>}, {transform_indices = @transform_2, window_bounds = array<i64: 1, 128>}, {transform_indices = @transform_3, window_bounds = array<i64: 1, 128>}, {transform_indices = @transform_4, window_bounds = array<i64: 1, 512, 128>}]} {
    %c0 = arith.constant 0 : index
    %c0_0 = arith.constant 0 : index
    %0 = vector.load %arg4[%c0, %c0_0] : memref<1x128xf32, #tpu.memory_space<vmem>>, vector<1x128xf32>
    %c0_1 = arith.constant 0 : index
    %c0_2 = arith.constant 0 : index
    %1 = vector.load %arg5[%c0_1, %c0_2] : memref<1x128xf32, #tpu.memory_space<vmem>>, vector<1x128xf32>
    %c0_3 = arith.constant 0 : index
    %c0_4 = arith.constant 0 : index
    %c0_5 = arith.constant 0 : index
    %2 = vector.load %arg2[%c0_3, %c0_4, %c0_5] : memref<1x576x12xbf16, #tpu.memory_space<vmem>>, vector<1x256x12xbf16>
    %3 = vector.shape_cast %2 : vector<1x256x12xbf16> to vector<256x12xbf16>
    %c0_6 = arith.constant 0 : index
    %c0_7 = arith.constant 0 : index
    %c0_8 = arith.constant 0 : index
    %4 = vector.load %arg3[%c0_6, %c0_7, %c0_8] : memref<3x12x128xbf16, #tpu.memory_space<vmem>>, vector<1x12x128xbf16>
    %5 = vector.shape_cast %4 : vector<1x12x128xbf16> to vector<12x128xbf16>
    %cst = arith.constant dense<0.000000e+00> : vector<256x128xf32>
    %6 = tpu.matmul %3, %5, %cst {dimension_numbers = #tpu.dot_dimension_numbers<[1], [0], [0], [1], [0, 0, 1, 1], [], []>} : vector<256x12xbf16>, vector<12x128xbf16>, vector<256x128xf32> -> vector<256x128xf32>
    %c0_9 = arith.constant 0 : index
    %c32 = arith.constant 32 : index
    %c0_10 = arith.constant 0 : index
    %7 = vector.load %arg2[%c0_9, %c32, %c0_10] : memref<1x576x12xbf16, #tpu.memory_space<vmem>>, vector<1x256x12xbf16>
    %8 = vector.shape_cast %7 : vector<1x256x12xbf16> to vector<256x12xbf16>
    %c1 = arith.constant 1 : index
    %c0_11 = arith.constant 0 : index
    %c0_12 = arith.constant 0 : index
    %9 = vector.load %arg3[%c1, %c0_11, %c0_12] : memref<3x12x128xbf16, #tpu.memory_space<vmem>>, vector<1x12x128xbf16>
    %10 = vector.shape_cast %9 : vector<1x12x128xbf16> to vector<12x128xbf16>
    %cst_13 = arith.constant dense<0.000000e+00> : vector<256x128xf32>
    %11 = tpu.matmul %8, %10, %cst_13 {dimension_numbers = #tpu.dot_dimension_numbers<[1], [0], [0], [1], [0, 0, 1, 1], [], []>} : vector<256x12xbf16>, vector<12x128xbf16>, vector<256x128xf32> -> vector<256x128xf32>
    %12 = arith.addf %6, %11 : vector<256x128xf32>
    %c0_14 = arith.constant 0 : index
    %c64 = arith.constant 64 : index
    %c0_15 = arith.constant 0 : index
    %13 = vector.load %arg2[%c0_14, %c64, %c0_15] : memref<1x576x12xbf16, #tpu.memory_space<vmem>>, vector<1x256x12xbf16>
    %14 = vector.shape_cast %13 : vector<1x256x12xbf16> to vector<256x12xbf16>
    %c2 = arith.constant 2 : index
    %c0_16 = arith.constant 0 : index
    %c0_17 = arith.constant 0 : index
    %15 = vector.load %arg3[%c2, %c0_16, %c0_17] : memref<3x12x128xbf16, #tpu.memory_space<vmem>>, vector<1x12x128xbf16>
    %16 = vector.shape_cast %15 : vector<1x12x128xbf16> to vector<12x128xbf16>
    %cst_18 = arith.constant dense<0.000000e+00> : vector<256x128xf32>
    %17 = tpu.matmul %14, %16, %cst_18 {dimension_numbers = #tpu.dot_dimension_numbers<[1], [0], [0], [1], [0, 0, 1, 1], [], []>} : vector<256x12xbf16>, vector<12x128xbf16>, vector<256x128xf32> -> vector<256x128xf32>
    %18 = arith.addf %12, %17 : vector<256x128xf32>
    %19 = vector.broadcast %0 : vector<1x128xf32> to vector<256x128xf32>
    %20 = arith.mulf %18, %19 : vector<256x128xf32>
    %21 = vector.broadcast %1 : vector<1x128xf32> to vector<256x128xf32>
    %22 = arith.addf %20, %21 : vector<256x128xf32>
    %cst_19 = arith.constant 0.000000e+00 : f32
    %23 = vector.broadcast %cst_19 : f32 to vector<256x128xf32>
    %24 = arith.subf %23, %22 : vector<256x128xf32>
    %25 = math.exp %24 : vector<256x128xf32>
    %cst_20 = arith.constant 1.000000e+00 : f32
    %26 = vector.broadcast %cst_20 : f32 to vector<256x128xf32>
    %27 = arith.addf %26, %25 : vector<256x128xf32>
    %28 = tpu.reciprocal %27 {approx = true} : vector<256x128xf32> -> vector<256x128xf32>
    %29 = arith.mulf %22, %28 : vector<256x128xf32>
    %c0_21 = arith.constant 0 : index
    %c0_22 = arith.constant 0 : index
    %c0_23 = arith.constant 0 : index
    %30 = vector.load %arg6[%c0_21, %c0_22, %c0_23] : memref<1x512x128xf32, #tpu.memory_space<vmem>>, vector<1x256x128xf32>
    %31 = vector.shape_cast %30 : vector<1x256x128xf32> to vector<256x128xf32>
    %32 = vector.shape_cast %29 : vector<256x128xf32> to vector<1x256x128xf32>
    tpu.vector_store %arg6[%c0_21, %c0_22, %c0_23], %32 {strides = array<i32>} : memref<1x512x128xf32, #tpu.memory_space<vmem>>, vector<1x256x128xf32>,
    %c0_24 = arith.constant 0 : index
    %c256 = arith.constant 256 : index
    %c0_25 = arith.constant 0 : index
    %33 = vector.load %arg2[%c0_24, %c256, %c0_25] : memref<1x576x12xbf16, #tpu.memory_space<vmem>>, vector<1x256x12xbf16>
    %34 = vector.shape_cast %33 : vector<1x256x12xbf16> to vector<256x12xbf16>
    %c0_26 = arith.constant 0 : index
    %c0_27 = arith.constant 0 : index
    %c0_28 = arith.constant 0 : index
    %35 = vector.load %arg3[%c0_26, %c0_27, %c0_28] : memref<3x12x128xbf16, #tpu.memory_space<vmem>>, vector<1x12x128xbf16>
    %36 = vector.shape_cast %35 : vector<1x12x128xbf16> to vector<12x128xbf16>
    %cst_29 = arith.constant dense<0.000000e+00> : vector<256x128xf32>
    %37 = tpu.matmul %34, %36, %cst_29 {dimension_numbers = #tpu.dot_dimension_numbers<[1], [0], [0], [1], [0, 0, 1, 1], [], []>} : vector<256x12xbf16>, vector<12x128xbf16>, vector<256x128xf32> -> vector<256x128xf32>
    %c0_30 = arith.constant 0 : index
    %c288 = arith.constant 288 : index
    %c0_31 = arith.constant 0 : index
    %38 = vector.load %arg2[%c0_30, %c288, %c0_31] : memref<1x576x12xbf16, #tpu.memory_space<vmem>>, vector<1x256x12xbf16>
    %39 = vector.shape_cast %38 : vector<1x256x12xbf16> to vector<256x12xbf16>
    %c1_32 = arith.constant 1 : index
    %c0_33 = arith.constant 0 : index
    %c0_34 = arith.constant 0 : index
    %40 = vector.load %arg3[%c1_32, %c0_33, %c0_34] : memref<3x12x128xbf16, #tpu.memory_space<vmem>>, vector<1x12x128xbf16>
    %41 = vector.shape_cast %40 : vector<1x12x128xbf16> to vector<12x128xbf16>
    %cst_35 = arith.constant dense<0.000000e+00> : vector<256x128xf32>
    %42 = tpu.matmul %39, %41, %cst_35 {dimension_numbers = #tpu.dot_dimension_numbers<[1], [0], [0], [1], [0, 0, 1, 1], [], []>} : vector<256x12xbf16>, vector<12x128xbf16>, vector<256x128xf32> -> vector<256x128xf32>
    %43 = arith.addf %37, %42 : vector<256x128xf32>
    %c0_36 = arith.constant 0 : index
    %c320 = arith.constant 320 : index
    %c0_37 = arith.constant 0 : index
    %44 = vector.load %arg2[%c0_36, %c320, %c0_37] : memref<1x576x12xbf16, #tpu.memory_space<vmem>>, vector<1x256x12xbf16>
    %45 = vector.shape_cast %44 : vector<1x256x12xbf16> to vector<256x12xbf16>
    %c2_38 = arith.constant 2 : index
    %c0_39 = arith.constant 0 : index
    %c0_40 = arith.constant 0 : index
    %46 = vector.load %arg3[%c2_38, %c0_39, %c0_40] : memref<3x12x128xbf16, #tpu.memory_space<vmem>>, vector<1x12x128xbf16>
    %47 = vector.shape_cast %46 : vector<1x12x128xbf16> to vector<12x128xbf16>
    %cst_41 = arith.constant dense<0.000000e+00> : vector<256x128xf32>
    %48 = tpu.matmul %45, %47, %cst_41 {dimension_numbers = #tpu.dot_dimension_numbers<[1], [0], [0], [1], [0, 0, 1, 1], [], []>} : vector<256x12xbf16>, vector<12x128xbf16>, vector<256x128xf32> -> vector<256x128xf32>
    %49 = arith.addf %43, %48 : vector<256x128xf32>
    %50 = vector.broadcast %0 : vector<1x128xf32> to vector<256x128xf32>
    %51 = arith.mulf %49, %50 : vector<256x128xf32>
    %52 = vector.broadcast %1 : vector<1x128xf32> to vector<256x128xf32>
    %53 = arith.addf %51, %52 : vector<256x128xf32>
    %cst_42 = arith.constant 0.000000e+00 : f32
    %54 = vector.broadcast %cst_42 : f32 to vector<256x128xf32>
    %55 = arith.subf %54, %53 : vector<256x128xf32>
    %56 = math.exp %55 : vector<256x128xf32>
    %cst_43 = arith.constant 1.000000e+00 : f32
    %57 = vector.broadcast %cst_43 : f32 to vector<256x128xf32>
    %58 = arith.addf %57, %56 : vector<256x128xf32>
    %59 = tpu.reciprocal %58 {approx = true} : vector<256x128xf32> -> vector<256x128xf32>
    %60 = arith.mulf %53, %59 : vector<256x128xf32>
    %c0_44 = arith.constant 0 : index
    %c256_45 = arith.constant 256 : index
    %c0_46 = arith.constant 0 : index
    %61 = vector.load %arg6[%c0_44, %c256_45, %c0_46] : memref<1x512x128xf32, #tpu.memory_space<vmem>>, vector<1x256x128xf32>
    %62 = vector.shape_cast %61 : vector<1x256x128xf32> to vector<256x128xf32>
    %63 = vector.shape_cast %60 : vector<256x128xf32> to vector<1x256x128xf32>
    tpu.vector_store %arg6[%c0_44, %c256_45, %c0_46], %63 {strides = array<i32>} : memref<1x512x128xf32, #tpu.memory_space<vmem>>, vector<1x256x128xf32>,
    return
  }
  func.func @transform_0(%arg0: i32, %arg1: i32) -> (i32, i32, i32) {
    %c0_i32 = arith.constant 0 : i32
    %c0_i32_0 = arith.constant 0 : i32
    %c0_i32_1 = arith.constant 0 : i32
    return %arg0, %c0_i32, %c0_i32_0 : i32, i32, i32
  }
  func.func @transform_1(%arg0: i32, %arg1: i32) -> (i32, i32, i32) {
    %c0_i32 = arith.constant 0 : i32
    %c0_i32_0 = arith.constant 0 : i32
    %c0_i32_1 = arith.constant 0 : i32
    return %c0_i32, %c0_i32_0, %arg1 : i32, i32, i32
  }
  func.func @transform_2(%arg0: i32, %arg1: i32) -> (i32, i32) {
    %c0_i32 = arith.constant 0 : i32
    %c0_i32_0 = arith.constant 0 : i32
    return %c0_i32, %arg1 : i32, i32
  }
  func.func @transform_3(%arg0: i32, %arg1: i32) -> (i32, i32) {
    %c0_i32 = arith.constant 0 : i32
    %c0_i32_0 = arith.constant 0 : i32
    return %c0_i32, %arg1 : i32, i32
  }
  func.func @transform_4(%arg0: i32, %arg1: i32) -> (i32, i32, i32) {
    %c0_i32 = arith.constant 0 : i32
    %c0_i32_0 = arith.constant 0 : i32
    return %arg0, %c0_i32, %arg1 : i32, i32, i32
  }
}

</mosaic_0001>

<llo_original>
// kernel: tpu_custom_call.1
$region0: #{tpu_custom_call.1}
  #allocation0 [shape = 'u32[]', space=smem, size = 0x4, offset = 0x4, fixed_abs, tag = 'smem constant byte address 0x4 - core index']
  #allocation1 [shape = 'u32[72,128]{1,0:T(1,128)}', space=vmem, size = 0x9000, scoped, tag = 'internal scratch']
  %s0 = inlined_call_operand.vmem [shape: bf16[2,576,12], index: 0, kind: input, shape index: {}]
  %s1 = inlined_call_operand.vmem [shape: bf16[3,12,128], index: 1, kind: input, shape index: {}]
  %s2 = inlined_call_operand.vmem [shape: f32[1,128], index: 2, kind: input, shape index: {}]
  %s3 = inlined_call_operand.vmem [shape: f32[1,128], index: 3, kind: input, shape index: {}]
  %s4 = inlined_call_operand.hbm [shape: f32[2,512,128], index: 4, kind: output, shape index: {}]
  %s5 = sld [smem:[#allocation0]]
  $region49: #{tpu_custom_call.1} parent=0
    _
  %s7 = ssub.s32 1, %s5
  %s8 = scalar_select 0, %s7, %s5
  $region1: #{tpu_custom_call.1} parent=0
    #allocation2 [shape = 'u8[524288]{0}', space=vmem, size = 0x80000, scoped, tag = 'output window, operand 0']
    #allocation3 [shape = 's32[2]{0}', space=sflag, size = 0x8, scoped, tag = 'scoped memory for tpu_custom_call.1']
    %9 = vsyncpa [#allocation3], 0
    %s10 = scalar_lea.sflag [#allocation3], 1
    %11 = vsyncpa %s10, 0
    loop: start=0, step=1, limit=4
    $region2: #{tpu_custom_call.1} parent=1 // loop_pre_header
      _
    $region3: #{tpu_custom_call.1} parent=1 // loop_header
      %s13 = sphi 0, %s17
      %p14 = scmp.ge.s32.totalorder %s13, 4
      %s20 = sphi 0, %s32
      %s21 = sphi 0, %s28
      %s22 = sphi 0, %s20
      %s23 = sphi 0, %s21
      %s24 = sphi 0, %s22
      %s25 = sphi 0, %s23
      %s35 = sphi 0, %s37
      %s38 = sphi 0, %s35
      %s39 = sphi 0, %s38
      %s55 = sphi 0, %s39
      %s61 = sphi 0, %s63
      %s64 = sphi 0, %s61
      %s65 = sphi 0, %s64
      %s81 = sphi 0, %s65
      %s87 = sphi 0, %s89
      %s90 = sphi 0, %s87
      %s91 = sphi 0, %s90
      %s107 = sphi 0, %s91
      %s113 = sphi 0, %s115
      %s116 = sphi 0, %s113
      %s117 = sphi 0, %s116
      %s133 = sphi 0, %s117
      %s141 = sphi 0, %s143
      %s144 = sphi 0, %s141
      %s145 = sphi 0, %s144
      %s161 = sphi 0, %s145
    $region4: #{tpu_custom_call.1} parent=1 // loop_header_branch
      %16 = sbr.rel (%p14) target = $region8
    $region5: #{tpu_custom_call.1} parent=1 // loop_body
      %s18 = ssub.s32 %s13, 1
      %s19 = ssub.s32 %s13, 2
      %s26 = sadd.s32 1, %s21
      %p27 = scmp.ge.s32.totalorder %s26, 1
      %s28 = scalar_select %p27, 0, %s26
      %s29 = sadd.s32 1, %s20
      %s30 = scalar_select %p27, %s29, %s20
      %p31 = scmp.ge.s32.totalorder %s30, 2
      %s32 = scalar_select %p31, 0, %s30
      %s33 = ssub.s32 %s20, %s32
      %p34 = scmp.eq.s32.totalorder %s33, 0
      %s36 = sadd.s32 %s35, 1
      %s37 = scalar_select %p34, %s35, %s36
      %p40 = pneg %p34
      %p41 = scmp.eq.s32.totalorder %s13, 1
      %p42 = por %p40, %p41
      %p43 = scmp.ne.s32.totalorder %s35, %s38
      %p44 = scmp.eq.s32.totalorder %s13, 0
      %p45 = por %p43, %p44
      %p46 = scmp.ne.s32.totalorder %s35, %s38
      %p47 = scmp.eq.s32.totalorder %s18, 1
      %p48 = por %p46, %p47
      %p49 = scmp.ne.s32.totalorder %s38, %s39
      %p50 = scmp.eq.s32.totalorder %s18, 0
      %p51 = por %p49, %p50
      %p52 = scmp.ne.s32.totalorder %s38, %s39
      %p53 = scmp.eq.s32.totalorder %s19, 1
      %p54 = por %p52, %p53
      %p56 = scmp.ne.s32.totalorder %s39, %s55
      %p57 = scmp.eq.s32.totalorder %s19, 0
      %p58 = por %p56, %p57
      %s59 = ssub.s32 %s21, %s28
      %p60 = scmp.eq.s32.totalorder %s59, 0
      %s62 = sadd.s32 %s61, 1
      %s63 = scalar_select %p60, %s61, %s62
      %p66 = pneg %p60
      %p67 = scmp.eq.s32.totalorder %s13, 1
      %p68 = por %p66, %p67
      %p69 = scmp.ne.s32.totalorder %s61, %s64
      %p70 = scmp.eq.s32.totalorder %s13, 0
      %p71 = por %p69, %p70
      %p72 = scmp.ne.s32.totalorder %s61, %s64
      %p73 = scmp.eq.s32.totalorder %s18, 1
      %p74 = por %p72, %p73
      %p75 = scmp.ne.s32.totalorder %s64, %s65
      %p76 = scmp.eq.s32.totalorder %s18, 0
      %p77 = por %p75, %p76
      %p78 = scmp.ne.s32.totalorder %s64, %s65
      %p79 = scmp.eq.s32.totalorder %s19, 1
      %p80 = por %p78, %p79
      %p82 = scmp.ne.s32.totalorder %s65, %s81
      %p83 = scmp.eq.s32.totalorder %s19, 0
      %p84 = por %p82, %p83
      %s85 = ssub.s32 %s21, %s28
      %p86 = scmp.eq.s32.totalorder %s85, 0
      %s88 = sadd.s32 %s87, 1
      %s89 = scalar_select %p86, %s87, %s88
      %p92 = pneg %p86
      %p93 = scmp.eq.s32.totalorder %s13, 1
      %p94 = por %p92, %p93
      %p95 = scmp.ne.s32.totalorder %s87, %s90
      %p96 = scmp.eq.s32.totalorder %s13, 0
      %p97 = por %p95, %p96
      %p98 = scmp.ne.s32.totalorder %s87, %s90
      %p99 = scmp.eq.s32.totalorder %s18, 1
      %p100 = por %p98, %p99
      %p101 = scmp.ne.s32.totalorder %s90, %s91
      %p102 = scmp.eq.s32.totalorder %s18, 0
      %p103 = por %p101, %p102
      %p104 = scmp.ne.s32.totalorder %s90, %s91
      %p105 = scmp.eq.s32.totalorder %s19, 1
      %p106 = por %p104, %p105
      %p108 = scmp.ne.s32.totalorder %s91, %s107
      %p109 = scmp.eq.s32.totalorder %s19, 0
      %p110 = por %p108, %p109
      %s111 = ssub.s32 %s21, %s28
      %p112 = scmp.eq.s32.totalorder %s111, 0
      %s114 = sadd.s32 %s113, 1
      %s115 = scalar_select %p112, %s113, %s114
      %p118 = pneg %p112
      %p119 = scmp.eq.s32.totalorder %s13, 1
      %p120 = por %p118, %p119
      %p121 = scmp.ne.s32.totalorder %s113, %s116
      %p122 = scmp.eq.s32.totalorder %s13, 0
      %p123 = por %p121, %p122
      %p124 = scmp.ne.s32.totalorder %s113, %s116
      %p125 = scmp.eq.s32.totalorder %s18, 1
      %p126 = por %p124, %p125
      %p127 = scmp.ne.s32.totalorder %s116, %s117
      %p128 = scmp.eq.s32.totalorder %s18, 0
      %p129 = por %p127, %p128
      %p130 = scmp.ne.s32.totalorder %s116, %s117
      %p131 = scmp.eq.s32.totalorder %s19, 1
      %p132 = por %p130, %p131
      %p134 = scmp.ne.s32.totalorder %s117, %s133
      %p135 = scmp.eq.s32.totalorder %s19, 0
      %p136 = por %p134, %p135
      %s137 = ssub.s32 %s20, %s32
      %s138 = ssub.s32 %s21, %s28
      %s139 = sor.u32 %s137, %s138
      %p140 = scmp.eq.s32.totalorder %s139, 0
      %s142 = sadd.s32 %s141, 1
      %s143 = scalar_select %p140, %s141, %s142
      %p146 = pneg %p140
      %p147 = scmp.eq.s32.totalorder %s13, 1
      %p148 = por %p146, %p147
      %p149 = scmp.ne.s32.totalorder %s141, %s144
      %p150 = scmp.eq.s32.totalorder %s13, 0
      %p151 = por %p149, %p150
      %p152 = scmp.ne.s32.totalorder %s141, %s144
      %p153 = scmp.eq.s32.totalorder %s18, 1
      %p154 = por %p152, %p153
      %p155 = scmp.ne.s32.totalorder %s144, %s145
      %p156 = scmp.eq.s32.totalorder %s18, 0
      %p157 = por %p155, %p156
      %p158 = scmp.ne.s32.totalorder %s144, %s145
      %p159 = scmp.eq.s32.totalorder %s19, 1
      %p160 = por %p158, %p159
      %p162 = scmp.ne.s32.totalorder %s145, %s161
      %p163 = scmp.eq.s32.totalorder %s19, 0
      %p164 = por %p162, %p163
      %p165 = scmp.le.s32.totalorder 1, %s13
      %p166 = scmp.lt.s32.totalorder %s13, 3
      %p167 = pnand %p165, %p166
      %p168 = pneg %p167
      // Predicated region
      $region9: #{tpu_custom_call.1} parent=5 // pred_check
        _
      $region10: #{tpu_custom_call.1} parent=5 // pred_check_branch
        %170 = sbr.rel (%p167) target = $region12
      $region11: #{tpu_custom_call.1} parent=5 // pred_region
        %s171 = ssub.s32 %s13, 1
        // Predicated region
        $region13: #{tpu_custom_call.1} parent=11 // pred_check
          %p172 = pneg %p77
        $region14: #{tpu_custom_call.1} parent=11 // pred_check_branch
          %174 = sbr.rel (%p172) target = $region16
        $region15: #{tpu_custom_call.1} parent=11 // pred_region
          %p175 = scmp.lt.s32.totalorder %s23, 0
          %s176 = scalar_select %p175, %s23, 0
          %s177 = smul.addr %s176, 4
          %s178 = scalar_lea.vmem %s1, %s177
        $region16: #{tpu_custom_call.1} parent=11 // pred_fallthru
          _
        // Predicated region
        $region17: #{tpu_custom_call.1} parent=11 // pred_check
          %p179 = pneg %p103
        $region18: #{tpu_custom_call.1} parent=11 // pred_check_branch
          %181 = sbr.rel (%p179) target = $region20
        $region19: #{tpu_custom_call.1} parent=11 // pred_region
          %p182 = scmp.lt.s32.totalorder %s23, 0
          %s183 = scalar_select %p182, %s23, 0
          %s184 = scalar_lea.vmem %s2, %s183
        $region20: #{tpu_custom_call.1} parent=11 // pred_fallthru
          _
        // Predicated region
        $region21: #{tpu_custom_call.1} parent=11 // pred_check
          %p185 = pneg %p129
        $region22: #{tpu_custom_call.1} parent=11 // pred_check_branch
          %187 = sbr.rel (%p185) target = $region24
        $region23: #{tpu_custom_call.1} parent=11 // pred_region
          %p188 = scmp.lt.s32.totalorder %s23, 0
          %s189 = scalar_select %p188, %s23, 0
          %s190 = scalar_lea.vmem %s3, %s189
        $region24: #{tpu_custom_call.1} parent=11 // pred_fallthru
          _
      $region12: #{tpu_custom_call.1} parent=5 // pred_fallthru
        _
      %p191 = scmp.lt.s32.totalorder %s13, 2
      // Predicated region
      $region25: #{tpu_custom_call.1} parent=5 // pred_check
        %p192 = pneg %p191
      $region26: #{tpu_custom_call.1} parent=5 // pred_check_branch
        %194 = sbr.rel (%p192) target = $region28
      $region27: #{tpu_custom_call.1} parent=5 // pred_region
        // Predicated region
        $region29: #{tpu_custom_call.1} parent=27 // pred_check
          %p195 = pneg %p45
        $region30: #{tpu_custom_call.1} parent=27 // pred_check_branch
          %197 = sbr.rel (%p195) target = $region32
        $region31: #{tpu_custom_call.1} parent=27 // pred_region
          %p198 = scmp.lt.s32.totalorder %s20, 1
          %s199 = scalar_select %p198, %s20, 1
          %s200 = smul.addr %s199, 72
          %s201 = smul.addr %s200, 4
          %s202 = scalar_lea.vmem %s0, %s201
        $region32: #{tpu_custom_call.1} parent=27 // pred_fallthru
          _
      $region28: #{tpu_custom_call.1} parent=5 // pred_fallthru
        _
      %p203 = scmp.le.s32.totalorder 1, %s13
      %p204 = scmp.lt.s32.totalorder %s13, 3
      %p205 = pnand %p203, %p204
      %p206 = pneg %p205
      // Predicated region
      $region33: #{tpu_custom_call.1} parent=5 // pred_check
        _
      $region34: #{tpu_custom_call.1} parent=5 // pred_check_branch
        %208 = sbr.rel (%p205) target = $region36
      $region35: #{tpu_custom_call.1} parent=5 // pred_region
        %s209 = ssub.s32 %s13, 1
        %p210 = scmp.lt.s32.totalorder %s22, 1
        %s211 = scalar_select %p210, %s22, 1
        %s212 = smul.addr %s211, 72
        %s213 = smul.addr %s212, 4
        %s214 = scalar_lea.vmem %s0, %s213
        %p215 = pneg %p51
        %p216 = pneg %p48
        %p217 = scmp.lt.s32.totalorder %s23, 0
        %s218 = scalar_select %p217, %s23, 0
        %s219 = smul.addr %s218, 4
        %s220 = scalar_lea.vmem %s1, %s219
        %p221 = pneg %p77
        %p222 = pneg %p74
        %p223 = scmp.lt.s32.totalorder %s23, 0
        %s224 = scalar_select %p223, %s23, 0
        %s225 = scalar_lea.vmem %s2, %s224
        %p226 = pneg %p103
        %p227 = pneg %p100
        %p228 = scmp.lt.s32.totalorder %s23, 0
        %s229 = scalar_select %p228, %s23, 0
        %s230 = scalar_lea.vmem %s3, %s229
        %p231 = pneg %p129
        %p232 = pneg %p126
        %p233 = pneg %p157
        %p234 = pneg %p154
        %s235 = sand.u32 %s144, 1
        %s236 = scalar_lea.sflag [#allocation3], %s235
        %s237 = sand.u32 %s144, 1
        %s238 = smul.addr %s237, 512
        %s239 = scalar_lea.vmem [#allocation2], %s238
        %p240 = scmp.lt.s32.totalorder %s22, 1
        %s241 = scalar_select %p240, %s22, 1
        %s242 = smul.addr %s241, 72
        %s243 = smul.addr %s242, 4
        %s244 = scalar_lea.vmem %s0, %s243
        %p245 = scmp.lt.s32.totalorder %s23, 0
        %s246 = scalar_select %p245, %s23, 0
        %s247 = smul.addr %s246, 4
        %s248 = scalar_lea.vmem %s1, %s247
        %p249 = scmp.lt.s32.totalorder %s23, 0
        %s250 = scalar_select %p249, %s23, 0
        %s251 = scalar_lea.vmem %s2, %s250
        %p252 = scmp.lt.s32.totalorder %s23, 0
        %s253 = scalar_select %p252, %s23, 0
        %s254 = scalar_lea.vmem %s3, %s253
        %v256 = vld [vmem:[%s251] sm:$0x1]
        %v257 = vld [vmem:[%s254] sm:$0x1]
        %v258 = vld [vmem:[%s244] sm:$0xf]
        %v259 = vld [vmem:[%s244 + $0x4] sm:$0xf]
        %v260 = vld [vmem:[%s244 + $0x8] sm:$0xf]
        %v261 = vld [vmem:[%s244 + $0xc] sm:$0xf]
        %v262 = vld [vmem:[%s244 + $0x10] sm:$0xf]
        %v263 = vld [vmem:[%s244 + $0x14] sm:$0xf]
        %v264 = vld [vmem:[%s244 + $0x18] sm:$0xf]
        %v265 = vld [vmem:[%s244 + $0x1c] sm:$0xf]
        %v266 = vld [vmem:[%s244 + $0x20] sm:$0xf]
        %v267 = vld [vmem:[%s244 + $0x24] sm:$0xf]
        %v268 = vld [vmem:[%s244 + $0x28] sm:$0xf]
        %v269 = vld [vmem:[%s244 + $0x2c] sm:$0xf]
        %v270 = vld [vmem:[%s244 + $0x30] sm:$0xf]
        %v271 = vld [vmem:[%s244 + $0x34] sm:$0xf]
        %v272 = vld [vmem:[%s244 + $0x38] sm:$0xf]
        %v273 = vld [vmem:[%s244 + $0x3c] sm:$0xf]
        %v274 = vld [vmem:[%s244 + $0x40] sm:$0xf]
        %v275 = vld [vmem:[%s244 + $0x44] sm:$0xf]
        %v276 = vld [vmem:[%s244 + $0x48] sm:$0xf]
        %v277 = vld [vmem:[%s244 + $0x4c] sm:$0xf]
        %v278 = vld [vmem:[%s244 + $0x50] sm:$0xf]
        %v279 = vld [vmem:[%s244 + $0x54] sm:$0xf]
        %v280 = vld [vmem:[%s244 + $0x58] sm:$0xf]
        %v281 = vld [vmem:[%s244 + $0x5c] sm:$0xf]
        %v282 = vld [vmem:[%s244 + $0x60] sm:$0xf]
        %v283 = vld [vmem:[%s244 + $0x64] sm:$0xf]
        %v284 = vld [vmem:[%s244 + $0x68] sm:$0xf]
        %v285 = vld [vmem:[%s244 + $0x6c] sm:$0xf]
        %v286 = vld [vmem:[%s244 + $0x70] sm:$0xf]
        %v287 = vld [vmem:[%s244 + $0x74] sm:$0xf]
        %v288 = vld [vmem:[%s244 + $0x78] sm:$0xf]
        %v289 = vld [vmem:[%s244 + $0x7c] sm:$0xf]
        %v290 = vld [vmem:[%s248] sm:$0xf]
        %v291 = vld [vmem:[%s248 + $0x4] sm:$0x3]
        %v292 = vld [vmem:[%s244 + $0x80] sm:$0xf]
        %v293 = vld [vmem:[%s244 + $0x84] sm:$0xf]
        %v294 = vld [vmem:[%s244 + $0x88] sm:$0xf]
        %v295 = vld [vmem:[%s244 + $0x8c] sm:$0xf]
        %s296 = scalar_lea.vmem %s248, 8
        %v297 = vld [vmem:[%s296] sm:$0xf]
        %v298 = vld [vmem:[%s296 + $0x4] sm:$0x3]
        %v331 = vunpack.c.l.b16 %v262
        %v332 = vunpack.c.l.b16 %v263
        %v333 = vunpack.c.l.b16 %v264
        %v334 = vunpack.c.l.b16 %v265
        %v335 = vunpack.c.l.b16 %v266
        %v336 = vunpack.c.l.b16 %v267
        %v337 = vunpack.c.l.b16 %v268
        %v338 = vunpack.c.l.b16 %v269
        %v339 = vunpack.c.l.b16 %v270
        %v340 = vunpack.c.l.b16 %v271
        %v341 = vunpack.c.l.b16 %v272
        %v342 = vunpack.c.l.b16 %v273
        %v343 = vunpack.c.l.b16 %v274
        %v344 = vunpack.c.l.b16 %v275
        %v345 = vunpack.c.l.b16 %v276
        %v346 = vunpack.c.l.b16 %v277
        %v347 = vunpack.c.l.b16 %v278
        %v348 = vunpack.c.l.b16 %v279
        %v349 = vunpack.c.l.b16 %v280
        %v350 = vunpack.c.l.b16 %v281
        %v351 = vunpack.c.l.b16 %v282
        %v352 = vunpack.c.l.b16 %v283
        %v353 = vunpack.c.l.b16 %v284
        %v354 = vunpack.c.l.b16 %v285
        %v355 = vunpack.c.l.b16 %v286
        %v356 = vunpack.c.l.b16 %v287
        %v357 = vunpack.c.l.b16 %v288
        %v358 = vunpack.c.l.b16 %v289
        %v359 = vunpack.c.l.b16 %v292
        %v360 = vunpack.c.l.b16 %v293
        %v361 = vunpack.c.l.b16 %v294
        %v362 = vunpack.c.l.b16 %v295
        %v363 = vpack.c.b16 %v332, %v331
        %v364 = vpack.c.b16 %v334, %v333
        %v365 = vpack.c.b16 %v336, %v335
        %v366 = vpack.c.b16 %v338, %v337
        %v367 = vpack.c.b16 %v340, %v339
        %v368 = vpack.c.b16 %v342, %v341
        %v369 = vpack.c.b16 %v344, %v343
        %v370 = vpack.c.b16 %v346, %v345
        %v371 = vpack.c.b16 %v348, %v347
        %v372 = vpack.c.b16 %v350, %v349
        %v373 = vpack.c.b16 %v352, %v351
        %v374 = vpack.c.b16 %v354, %v353
        %v375 = vpack.c.b16 %v356, %v355
        %v376 = vpack.c.b16 %v358, %v357
        %v377 = vpack.c.b16 %v360, %v359
        %v378 = vpack.c.b16 %v362, %v361
        %v381 = vunpack.c.l.b16 %v297
        %v382 = vunpack.c.l.b16 %v298
        %v383 = vpack.c.b16 %v382, %v381
        %vm384 = vcmask 97280
        %v386 = vsel %vm384, %v363, 0
        %v389 = vsel %vm384, %v364, 0
        %v392 = vsel %vm384, %v365, 0
        %v395 = vsel %vm384, %v366, 0
        %v398 = vsel %vm384, %v367, 0
        %v401 = vsel %vm384, %v368, 0
        %v404 = vsel %vm384, %v369, 0
        %v407 = vsel %vm384, %v370, 0
        %v410 = vsel %vm384, %v371, 0
        %v413 = vsel %vm384, %v372, 0
        %v416 = vsel %vm384, %v373, 0
        %v419 = vsel %vm384, %v374, 0
        %v422 = vsel %vm384, %v375, 0
        %v425 = vsel %vm384, %v376, 0
        %v428 = vsel %vm384, %v377, 0
        %v431 = vsel %vm384, %v378, 0
        %vm433 = vcmask 1045504
        %v435 = vsel %vm433, %v383, 0
        %437 = vmatpush.bf16.msra.mxu0 0
        %438 = vmatpush.bf16.msra.mxu0 0
        %439 = vmatpush.bf16.msra.mxu0 0
        %440 = vmatpush.bf16.msra.mxu0 0
        %441 = vmatpush.bf16.msra.mxu0 0
        %442 = vmatpush.bf16.msra.mxu0 0
        %443 = vmatpush.bf16.msra.mxu0 0
        %444 = vmatpush.bf16.msra.mxu0 %v435
        %445 = vmatmul.bf16.gmra.mxu0 %v386
        %v446 = vpop.f32.mrf.mxu0
        %v447 = vadd.f32 0.0, %v446
        %v448 = vpop.f32.mrf.mxu0
        %v449 = vadd.f32 0.0, %v448
        %450 = vmatmul.bf16.gmra.mxu0 %v389
        %v451 = vpop.f32.mrf.mxu0
        %v452 = vadd.f32 0.0, %v451
        %v453 = vpop.f32.mrf.mxu0
        %v454 = vadd.f32 0.0, %v453
        %455 = vmatmul.bf16.gmra.mxu0 %v392
        %v456 = vpop.f32.mrf.mxu0
        %v457 = vadd.f32 0.0, %v456
        %v458 = vpop.f32.mrf.mxu0
        %v459 = vadd.f32 0.0, %v458
        %460 = vmatmul.bf16.gmra.mxu0 %v395
        %v461 = vpop.f32.mrf.mxu0
        %v462 = vadd.f32 0.0, %v461
        %v463 = vpop.f32.mrf.mxu0
        %v464 = vadd.f32 0.0, %v463
        %465 = vmatmul.bf16.gmra.mxu0 %v398
        %v466 = vpop.f32.mrf.mxu0
        %v467 = vadd.f32 0.0, %v466
        %v468 = vpop.f32.mrf.mxu0
        %v469 = vadd.f32 0.0, %v468
        %470 = vmatmul.bf16.gmra.mxu0 %v401
        %v471 = vpop.f32.mrf.mxu0
        %v472 = vadd.f32 0.0, %v471
        %v473 = vpop.f32.mrf.mxu0
        %v474 = vadd.f32 0.0, %v473
        %475 = vmatmul.bf16.gmra.mxu0 %v404
        %v476 = vpop.f32.mrf.mxu0
        %v477 = vadd.f32 0.0, %v476
        %v478 = vpop.f32.mrf.mxu0
        %v479 = vadd.f32 0.0, %v478
        %480 = vmatmul.bf16.gmra.mxu0 %v407
        %v481 = vpop.f32.mrf.mxu0
        %v482 = vadd.f32 0.0, %v481
        %v483 = vpop.f32.mrf.mxu0
        %v484 = vadd.f32 0.0, %v483
        %485 = vmatmul.bf16.gmra.mxu0 %v410
        %v486 = vpop.f32.mrf.mxu0
        %v487 = vadd.f32 0.0, %v486
        %v488 = vpop.f32.mrf.mxu0
        %v489 = vadd.f32 0.0, %v488
        %490 = vmatmul.bf16.gmra.mxu0 %v413
        %v491 = vpop.f32.mrf.mxu0
        %v492 = vadd.f32 0.0, %v491
        %v493 = vpop.f32.mrf.mxu0
        %v494 = vadd.f32 0.0, %v493
        %495 = vmatmul.bf16.gmra.mxu0 %v416
        %v496 = vpop.f32.mrf.mxu0
        %v497 = vadd.f32 0.0, %v496
        %v498 = vpop.f32.mrf.mxu0
        %v499 = vadd.f32 0.0, %v498
        %500 = vmatmul.bf16.gmra.mxu0 %v419
        %v501 = vpop.f32.mrf.mxu0
        %v502 = vadd.f32 0.0, %v501
        %v503 = vpop.f32.mrf.mxu0
        %v504 = vadd.f32 0.0, %v503
        %505 = vmatmul.bf16.gmra.mxu0 %v422
        %v506 = vpop.f32.mrf.mxu0
        %v507 = vadd.f32 0.0, %v506
        %v508 = vpop.f32.mrf.mxu0
        %v509 = vadd.f32 0.0, %v508
        %510 = vmatmul.bf16.gmra.mxu0 %v425
        %v511 = vpop.f32.mrf.mxu0
        %v512 = vadd.f32 0.0, %v511
        %v513 = vpop.f32.mrf.mxu0
        %v514 = vadd.f32 0.0, %v513
        %515 = vmatmul.bf16.gmra.mxu0 %v428
        %v516 = vpop.f32.mrf.mxu0
        %v517 = vadd.f32 0.0, %v516
        %v518 = vpop.f32.mrf.mxu0
        %v519 = vadd.f32 0.0, %v518
        %520 = vmatmul.bf16.gmra.mxu0 %v431
        %v521 = vpop.f32.mrf.mxu0
        %v522 = vadd.f32 0.0, %v521
        %v523 = vpop.f32.mrf.mxu0
        %v524 = vadd.f32 0.0, %v523
        %525 = vdwg.mxu0
        %v530 = vunpack.c.l.b16 %v258
        %v531 = vunpack.c.l.b16 %v259
        %v532 = vunpack.c.l.b16 %v260
        %v533 = vunpack.c.l.b16 %v261
        %v534 = vpack.c.b16 %v531, %v530
        %v535 = vpack.c.b16 %v533, %v532
        %v538 = vunpack.c.l.b16 %v290
        %v539 = vunpack.c.l.b16 %v291
        %v540 = vpack.c.b16 %v539, %v538
        %v542 = vsel %vm384, %v534, 0
        %v545 = vsel %vm384, %v535, 0
        %v548 = vsel %vm433, %v540, 0
        %550 = vmatpush.bf16.msra.mxu0 0
        %551 = vmatpush.bf16.msra.mxu0 0
        %552 = vmatpush.bf16.msra.mxu0 0
        %553 = vmatpush.bf16.msra.mxu0 0
        %554 = vmatpush.bf16.msra.mxu0 0
        %555 = vmatpush.bf16.msra.mxu0 0
        %556 = vmatpush.bf16.msra.mxu0 0
        %557 = vmatpush.bf16.msra.mxu0 %v548
        %558 = vmatmul.bf16.gmra.mxu0 %v542
        %v559 = vpop.f32.mrf.mxu0
        %v560 = vadd.f32 %v447, %v559
        %v561 = vpop.f32.mrf.mxu0
        %v562 = vadd.f32 %v449, %v561
        %563 = vmatmul.bf16.gmra.mxu0 %v545
        %v564 = vpop.f32.mrf.mxu0
        %v565 = vadd.f32 %v452, %v564
        %v566 = vpop.f32.mrf.mxu0
        %v567 = vadd.f32 %v454, %v566
        %568 = vmatmul.bf16.gmra.mxu0 %v386
        %v569 = vpop.f32.mrf.mxu0
        %v570 = vadd.f32 %v457, %v569
        %v571 = vpop.f32.mrf.mxu0
        %v572 = vadd.f32 %v459, %v571
        %573 = vmatmul.bf16.gmra.mxu0 %v389
        %v574 = vpop.f32.mrf.mxu0
        %v575 = vadd.f32 %v462, %v574
        %v576 = vpop.f32.mrf.mxu0
        %v577 = vadd.f32 %v464, %v576
        %578 = vmatmul.bf16.gmra.mxu0 %v392
        %v579 = vpop.f32.mrf.mxu0
        %v580 = vadd.f32 %v467, %v579
        %v581 = vpop.f32.mrf.mxu0
        %v582 = vadd.f32 %v469, %v581
        %583 = vmatmul.bf16.gmra.mxu0 %v395
        %v584 = vpop.f32.mrf.mxu0
        %v585 = vadd.f32 %v472, %v584
        %v586 = vpop.f32.mrf.mxu0
        %v587 = vadd.f32 %v474, %v586
        %588 = vmatmul.bf16.gmra.mxu0 %v398
        %v589 = vpop.f32.mrf.mxu0
        %v590 = vadd.f32 %v477, %v589
        %v591 = vpop.f32.mrf.mxu0
        %v592 = vadd.f32 %v479, %v591
        %593 = vmatmul.bf16.gmra.mxu0 %v401
        %v594 = vpop.f32.mrf.mxu0
        %v595 = vadd.f32 %v482, %v594
        %v596 = vpop.f32.mrf.mxu0
        %v597 = vadd.f32 %v484, %v596
        %598 = vmatmul.bf16.gmra.mxu0 %v404
        %v599 = vpop.f32.mrf.mxu0
        %v600 = vadd.f32 %v487, %v599
        %v601 = vpop.f32.mrf.mxu0
        %v602 = vadd.f32 %v489, %v601
        %603 = vmatmul.bf16.gmra.mxu0 %v407
        %v604 = vpop.f32.mrf.mxu0
        %v605 = vadd.f32 %v492, %v604
        %v606 = vpop.f32.mrf.mxu0
        %v607 = vadd.f32 %v494, %v606
        %608 = vmatmul.bf16.gmra.mxu0 %v410
        %v609 = vpop.f32.mrf.mxu0
        %v610 = vadd.f32 %v497, %v609
        %v611 = vpop.f32.mrf.mxu0
        %v612 = vadd.f32 %v499, %v611
        %613 = vmatmul.bf16.gmra.mxu0 %v413
        %v614 = vpop.f32.mrf.mxu0
        %v615 = vadd.f32 %v502, %v614
        %v616 = vpop.f32.mrf.mxu0
        %v617 = vadd.f32 %v504, %v616
        %618 = vmatmul.bf16.gmra.mxu0 %v416
        %v619 = vpop.f32.mrf.mxu0
        %v620 = vadd.f32 %v507, %v619
        %v621 = vpop.f32.mrf.mxu0
        %v622 = vadd.f32 %v509, %v621
        %623 = vmatmul.bf16.gmra.mxu0 %v419
        %v624 = vpop.f32.mrf.mxu0
        %v625 = vadd.f32 %v512, %v624
        %v626 = vpop.f32.mrf.mxu0
        %v627 = vadd.f32 %v514, %v626
        %628 = vmatmul.bf16.gmra.mxu0 %v422
        %v629 = vpop.f32.mrf.mxu0
        %v630 = vadd.f32 %v517, %v629
        %v631 = vpop.f32.mrf.mxu0
        %v632 = vadd.f32 %v519, %v631
        %633 = vmatmul.bf16.gmra.mxu0 %v425
        %v634 = vpop.f32.mrf.mxu0
        %v635 = vadd.f32 %v522, %v634
        %v636 = vpop.f32.mrf.mxu0
        %v637 = vadd.f32 %v524, %v636
        %638 = vdwg.mxu0
        %v639 = vld [vmem:[%s244 + $0x20] sm:$0xf]
        %v640 = vld [vmem:[%s244 + $0x24] sm:$0xf]
        %v641 = vld [vmem:[%s244 + $0x28] sm:$0xf]
        %v642 = vld [vmem:[%s244 + $0x2c] sm:$0xf]
        %v643 = vld [vmem:[%s244 + $0x30] sm:$0xf]
        %v644 = vld [vmem:[%s244 + $0x34] sm:$0xf]
        %v645 = vld [vmem:[%s244 + $0x38] sm:$0xf]
        %v646 = vld [vmem:[%s244 + $0x3c] sm:$0xf]
        %v647 = vld [vmem:[%s244 + $0x40] sm:$0xf]
        %v648 = vld [vmem:[%s244 + $0x44] sm:$0xf]
        %v649 = vld [vmem:[%s244 + $0x48] sm:$0xf]
        %v650 = vld [vmem:[%s244 + $0x4c] sm:$0xf]
        %v651 = vld [vmem:[%s244 + $0x50] sm:$0xf]
        %v652 = vld [vmem:[%s244 + $0x54] sm:$0xf]
        %v653 = vld [vmem:[%s244 + $0x58] sm:$0xf]
        %v654 = vld [vmem:[%s244 + $0x5c] sm:$0xf]
        %v655 = vld [vmem:[%s244 + $0x60] sm:$0xf]
        %v656 = vld [vmem:[%s244 + $0x64] sm:$0xf]
        %v657 = vld [vmem:[%s244 + $0x68] sm:$0xf]
        %v658 = vld [vmem:[%s244 + $0x6c] sm:$0xf]
        %v659 = vld [vmem:[%s244 + $0x70] sm:$0xf]
        %v660 = vld [vmem:[%s244 + $0x74] sm:$0xf]
        %v661 = vld [vmem:[%s244 + $0x78] sm:$0xf]
        %v662 = vld [vmem:[%s244 + $0x7c] sm:$0xf]
        %v663 = vld [vmem:[%s244 + $0x80] sm:$0xf]
        %v664 = vld [vmem:[%s244 + $0x84] sm:$0xf]
        %v665 = vld [vmem:[%s244 + $0x88] sm:$0xf]
        %v666 = vld [vmem:[%s244 + $0x8c] sm:$0xf]
        %v667 = vld [vmem:[%s244 + $0x90] sm:$0xf]
        %v668 = vld [vmem:[%s244 + $0x94] sm:$0xf]
        %v669 = vld [vmem:[%s244 + $0x98] sm:$0xf]
        %v670 = vld [vmem:[%s244 + $0x9c] sm:$0xf]
        %s671 = scalar_lea.vmem %s248, 16
        %v672 = vld [vmem:[%s671] sm:$0xf]
        %v673 = vld [vmem:[%s671 + $0x4] sm:$0x3]
        %v706 = vunpack.c.l.b16 %v639
        %v707 = vunpack.c.l.b16 %v640
        %v708 = vunpack.c.l.b16 %v641
        %v709 = vunpack.c.l.b16 %v642
        %v710 = vunpack.c.l.b16 %v643
        %v711 = vunpack.c.l.b16 %v644
        %v712 = vunpack.c.l.b16 %v645
        %v713 = vunpack.c.l.b16 %v646
        %v714 = vunpack.c.l.b16 %v647
        %v715 = vunpack.c.l.b16 %v648
        %v716 = vunpack.c.l.b16 %v649
        %v717 = vunpack.c.l.b16 %v650
        %v718 = vunpack.c.l.b16 %v651
        %v719 = vunpack.c.l.b16 %v652
        %v720 = vunpack.c.l.b16 %v653
        %v721 = vunpack.c.l.b16 %v654
        %v722 = vunpack.c.l.b16 %v655
        %v723 = vunpack.c.l.b16 %v656
        %v724 = vunpack.c.l.b16 %v657
        %v725 = vunpack.c.l.b16 %v658
        %v726 = vunpack.c.l.b16 %v659
        %v727 = vunpack.c.l.b16 %v660
        %v728 = vunpack.c.l.b16 %v661
        %v729 = vunpack.c.l.b16 %v662
        %v730 = vunpack.c.l.b16 %v663
        %v731 = vunpack.c.l.b16 %v664
        %v732 = vunpack.c.l.b16 %v665
        %v733 = vunpack.c.l.b16 %v666
        %v734 = vunpack.c.l.b16 %v667
        %v735 = vunpack.c.l.b16 %v668
        %v736 = vunpack.c.l.b16 %v669
        %v737 = vunpack.c.l.b16 %v670
        %v738 = vpack.c.b16 %v707, %v706
        %v739 = vpack.c.b16 %v709, %v708
        %v740 = vpack.c.b16 %v711, %v710
        %v741 = vpack.c.b16 %v713, %v712
        %v742 = vpack.c.b16 %v715, %v714
        %v743 = vpack.c.b16 %v717, %v716
        %v744 = vpack.c.b16 %v719, %v718
        %v745 = vpack.c.b16 %v721, %v720
        %v746 = vpack.c.b16 %v723, %v722
        %v747 = vpack.c.b16 %v725, %v724
        %v748 = vpack.c.b16 %v727, %v726
        %v749 = vpack.c.b16 %v729, %v728
        %v750 = vpack.c.b16 %v731, %v730
        %v751 = vpack.c.b16 %v733, %v732
        %v752 = vpack.c.b16 %v735, %v734
        %v753 = vpack.c.b16 %v737, %v736
        %v756 = vunpack.c.l.b16 %v672
        %v757 = vunpack.c.l.b16 %v673
        %v758 = vpack.c.b16 %v757, %v756
        %v760 = vsel %vm384, %v738, 0
        %v763 = vsel %vm384, %v739, 0
        %v766 = vsel %vm384, %v740, 0
        %v769 = vsel %vm384, %v741, 0
        %v772 = vsel %vm384, %v742, 0
        %v775 = vsel %vm384, %v743, 0
        %v778 = vsel %vm384, %v744, 0
        %v781 = vsel %vm384, %v745, 0
        %v784 = vsel %vm384, %v746, 0
        %v787 = vsel %vm384, %v747, 0
        %v790 = vsel %vm384, %v748, 0
        %v793 = vsel %vm384, %v749, 0
        %v796 = vsel %vm384, %v750, 0
        %v799 = vsel %vm384, %v751, 0
        %v802 = vsel %vm384, %v752, 0
        %v805 = vsel %vm384, %v753, 0
        %v808 = vsel %vm433, %v758, 0
        %810 = vmatpush.bf16.msra.mxu0 0
        %811 = vmatpush.bf16.msra.mxu0 0
        %812 = vmatpush.bf16.msra.mxu0 0
        %813 = vmatpush.bf16.msra.mxu0 0
        %814 = vmatpush.bf16.msra.mxu0 0
        %815 = vmatpush.bf16.msra.mxu0 0
        %816 = vmatpush.bf16.msra.mxu0 0
        %817 = vmatpush.bf16.msra.mxu0 %v808
        %818 = vmatmul.bf16.gmra.mxu0 %v760
        %v819 = vpop.f32.mrf.mxu0
        %v820 = vadd.f32 0.0, %v819
        %v821 = vpop.f32.mrf.mxu0
        %v822 = vadd.f32 0.0, %v821
        %823 = vmatmul.bf16.gmra.mxu0 %v763
        %v824 = vpop.f32.mrf.mxu0
        %v825 = vadd.f32 0.0, %v824
        %v826 = vpop.f32.mrf.mxu0
        %v827 = vadd.f32 0.0, %v826
        %828 = vmatmul.bf16.gmra.mxu0 %v766
        %v829 = vpop.f32.mrf.mxu0
        %v830 = vadd.f32 0.0, %v829
        %v831 = vpop.f32.mrf.mxu0
        %v832 = vadd.f32 0.0, %v831
        %833 = vmatmul.bf16.gmra.mxu0 %v769
        %v834 = vpop.f32.mrf.mxu0
        %v835 = vadd.f32 0.0, %v834
        %v836 = vpop.f32.mrf.mxu0
        %v837 = vadd.f32 0.0, %v836
        %838 = vmatmul.bf16.gmra.mxu0 %v772
        %v839 = vpop.f32.mrf.mxu0
        %v840 = vadd.f32 0.0, %v839
        %v841 = vpop.f32.mrf.mxu0
        %v842 = vadd.f32 0.0, %v841
        %843 = vmatmul.bf16.gmra.mxu0 %v775
        %v844 = vpop.f32.mrf.mxu0
        %v845 = vadd.f32 0.0, %v844
        %v846 = vpop.f32.mrf.mxu0
        %v847 = vadd.f32 0.0, %v846
        %848 = vmatmul.bf16.gmra.mxu0 %v778
        %v849 = vpop.f32.mrf.mxu0
        %v850 = vadd.f32 0.0, %v849
        %v851 = vpop.f32.mrf.mxu0
        %v852 = vadd.f32 0.0, %v851
        %853 = vmatmul.bf16.gmra.mxu0 %v781
        %v854 = vpop.f32.mrf.mxu0
        %v855 = vadd.f32 0.0, %v854
        %v856 = vpop.f32.mrf.mxu0
        %v857 = vadd.f32 0.0, %v856
        %858 = vmatmul.bf16.gmra.mxu0 %v784
        %v859 = vpop.f32.mrf.mxu0
        %v860 = vadd.f32 0.0, %v859
        %v861 = vpop.f32.mrf.mxu0
        %v862 = vadd.f32 0.0, %v861
        %863 = vmatmul.bf16.gmra.mxu0 %v787
        %v864 = vpop.f32.mrf.mxu0
        %v865 = vadd.f32 0.0, %v864
        %v866 = vpop.f32.mrf.mxu0
        %v867 = vadd.f32 0.0, %v866
        %868 = vmatmul.bf16.gmra.mxu0 %v790
        %v869 = vpop.f32.mrf.mxu0
        %v870 = vadd.f32 0.0, %v869
        %v871 = vpop.f32.mrf.mxu0
        %v872 = vadd.f32 0.0, %v871
        %873 = vmatmul.bf16.gmra.mxu0 %v793
        %v874 = vpop.f32.mrf.mxu0
        %v875 = vadd.f32 0.0, %v874
        %v876 = vpop.f32.mrf.mxu0
        %v877 = vadd.f32 0.0, %v876
        %878 = vmatmul.bf16.gmra.mxu0 %v796
        %v879 = vpop.f32.mrf.mxu0
        %v880 = vadd.f32 0.0, %v879
        %v881 = vpop.f32.mrf.mxu0
        %v882 = vadd.f32 0.0, %v881
        %883 = vmatmul.bf16.gmra.mxu0 %v799
        %v884 = vpop.f32.mrf.mxu0
        %v885 = vadd.f32 0.0, %v884
        %v886 = vpop.f32.mrf.mxu0
        %v887 = vadd.f32 0.0, %v886
        %888 = vmatmul.bf16.gmra.mxu0 %v802
        %v889 = vpop.f32.mrf.mxu0
        %v890 = vadd.f32 0.0, %v889
        %v891 = vpop.f32.mrf.mxu0
        %v892 = vadd.f32 0.0, %v891
        %893 = vmatmul.bf16.gmra.mxu0 %v805
        %v894 = vpop.f32.mrf.mxu0
        %v895 = vadd.f32 0.0, %v894
        %v896 = vpop.f32.mrf.mxu0
        %v897 = vadd.f32 0.0, %v896
        %898 = vdwg.mxu0
        %v899 = vadd.f32 %v560, %v820
        %v900 = vadd.f32 %v562, %v822
        %v901 = vadd.f32 %v565, %v825
        %v902 = vadd.f32 %v567, %v827
        %v903 = vadd.f32 %v570, %v830
        %v904 = vadd.f32 %v572, %v832
        %v905 = vadd.f32 %v575, %v835
        %v906 = vadd.f32 %v577, %v837
        %v907 = vadd.f32 %v580, %v840
        %v908 = vadd.f32 %v582, %v842
        %v909 = vadd.f32 %v585, %v845
        %v910 = vadd.f32 %v587, %v847
        %v911 = vadd.f32 %v590, %v850
        %v912 = vadd.f32 %v592, %v852
        %v913 = vadd.f32 %v595, %v855
        %v914 = vadd.f32 %v597, %v857
        %v915 = vadd.f32 %v600, %v860
        %v916 = vadd.f32 %v602, %v862
        %v917 = vadd.f32 %v605, %v865
        %v918 = vadd.f32 %v607, %v867
        %v919 = vadd.f32 %v610, %v870
        %v920 = vadd.f32 %v612, %v872
        %v921 = vadd.f32 %v615, %v875
        %v922 = vadd.f32 %v617, %v877
        %v923 = vadd.f32 %v620, %v880
        %v924 = vadd.f32 %v622, %v882
        %v925 = vadd.f32 %v625, %v885
        %v926 = vadd.f32 %v627, %v887
        %v927 = vadd.f32 %v630, %v890
        %v928 = vadd.f32 %v632, %v892
        %v929 = vadd.f32 %v635, %v895
        %v930 = vadd.f32 %v637, %v897
        %v932 = vperm.slane %v256, 0
        %v934 = vmul.f32 %v899, %v932
        %v935 = vmul.f32 %v900, %v932
        %v936 = vmul.f32 %v901, %v932
        %v937 = vmul.f32 %v902, %v932
        %v938 = vmul.f32 %v903, %v932
        %v939 = vmul.f32 %v904, %v932
        %v940 = vmul.f32 %v905, %v932
        %v941 = vmul.f32 %v906, %v932
        %v942 = vmul.f32 %v907, %v932
        %v943 = vmul.f32 %v908, %v932
        %v944 = vmul.f32 %v909, %v932
        %v945 = vmul.f32 %v910, %v932
        %v946 = vmul.f32 %v911, %v932
        %v947 = vmul.f32 %v912, %v932
        %v948 = vmul.f32 %v913, %v932
        %v949 = vmul.f32 %v914, %v932
        %v950 = vmul.f32 %v915, %v932
        %v951 = vmul.f32 %v916, %v932
        %v952 = vmul.f32 %v917, %v932
        %v953 = vmul.f32 %v918, %v932
        %v954 = vmul.f32 %v919, %v932
        %v955 = vmul.f32 %v920, %v932
        %v956 = vmul.f32 %v921, %v932
        %v957 = vmul.f32 %v922, %v932
        %v958 = vmul.f32 %v923, %v932
        %v959 = vmul.f32 %v924, %v932
        %v960 = vmul.f32 %v925, %v932
        %v961 = vmul.f32 %v926, %v932
        %v962 = vmul.f32 %v927, %v932
        %v963 = vmul.f32 %v928, %v932
        %v964 = vmul.f32 %v929, %v932
        %v965 = vmul.f32 %v930, %v932
        %v967 = vperm.slane %v257, 0
        %v969 = vadd.f32 %v934, %v967
        %v970 = vadd.f32 %v935, %v967
        %v971 = vadd.f32 %v936, %v967
        %v972 = vadd.f32 %v937, %v967
        %v973 = vadd.f32 %v938, %v967
        %v974 = vadd.f32 %v939, %v967
        %v975 = vadd.f32 %v940, %v967
        %v976 = vadd.f32 %v941, %v967
        %v977 = vadd.f32 %v942, %v967
        %v978 = vadd.f32 %v943, %v967
        %v979 = vadd.f32 %v944, %v967
        %v980 = vadd.f32 %v945, %v967
        %v981 = vadd.f32 %v946, %v967
        %v982 = vadd.f32 %v947, %v967
        %v983 = vadd.f32 %v948, %v967
        %v984 = vadd.f32 %v949, %v967
        %v985 = vadd.f32 %v950, %v967
        %v986 = vadd.f32 %v951, %v967
        %v987 = vadd.f32 %v952, %v967
        %v988 = vadd.f32 %v953, %v967
        %v989 = vadd.f32 %v954, %v967
        %v990 = vadd.f32 %v955, %v967
        %v991 = vadd.f32 %v956, %v967
        %v992 = vadd.f32 %v957, %v967
        %v993 = vadd.f32 %v958, %v967
        %v994 = vadd.f32 %v959, %v967
        %v995 = vadd.f32 %v960, %v967
        %v996 = vadd.f32 %v961, %v967
        %v997 = vadd.f32 %v962, %v967
        %v998 = vadd.f32 %v963, %v967
        %v999 = vadd.f32 %v964, %v967
        %v1000 = vadd.f32 %v965, %v967
        %v1001 = vsub.f32 0.0, %v969
        %v1002 = vsub.f32 0.0, %v970
        %v1003 = vsub.f32 0.0, %v971
        %v1004 = vsub.f32 0.0, %v972
        %v1005 = vsub.f32 0.0, %v973
        %v1006 = vsub.f32 0.0, %v974
        %v1007 = vsub.f32 0.0, %v975
        %v1008 = vsub.f32 0.0, %v976
        %v1009 = vsub.f32 0.0, %v977
        %v1010 = vsub.f32 0.0, %v978
        %v1011 = vsub.f32 0.0, %v979
        %v1012 = vsub.f32 0.0, %v980
        %v1013 = vsub.f32 0.0, %v981
        %v1014 = vsub.f32 0.0, %v982
        %v1015 = vsub.f32 0.0, %v983
        %v1016 = vsub.f32 0.0, %v984
        %v1017 = vsub.f32 0.0, %v985
        %v1018 = vsub.f32 0.0, %v986
        %v1019 = vsub.f32 0.0, %v987
        %v1020 = vsub.f32 0.0, %v988
        %v1021 = vsub.f32 0.0, %v989
        %v1022 = vsub.f32 0.0, %v990
        %v1023 = vsub.f32 0.0, %v991
        %v1024 = vsub.f32 0.0, %v992
        %v1025 = vsub.f32 0.0, %v993
        %v1026 = vsub.f32 0.0, %v994
        %v1027 = vsub.f32 0.0, %v995
        %v1028 = vsub.f32 0.0, %v996
        %v1029 = vsub.f32 0.0, %v997
        %v1030 = vsub.f32 0.0, %v998
        %v1031 = vsub.f32 0.0, %v999
        %v1032 = vsub.f32 0.0, %v1000
        %v1033 = vmul.f32 %v1001, 1.442695
        %v1034 = vpow.pop %v1033
        %v1035 = vmul.f32 %v1002, 1.442695
        %v1036 = vpow.pop %v1035
        %v1037 = vmul.f32 %v1003, 1.442695
        %v1038 = vpow.pop %v1037
        %v1039 = vmul.f32 %v1004, 1.442695
        %v1040 = vpow.pop %v1039
        %v1041 = vmul.f32 %v1005, 1.442695
        %v1042 = vpow.pop %v1041
        %v1043 = vmul.f32 %v1006, 1.442695
        %v1044 = vpow.pop %v1043
        %v1045 = vmul.f32 %v1007, 1.442695
        %v1046 = vpow.pop %v1045
        %v1047 = vmul.f32 %v1008, 1.442695
        %v1048 = vpow.pop %v1047
        %v1049 = vmul.f32 %v1009, 1.442695
        %v1050 = vpow.pop %v1049
        %v1051 = vmul.f32 %v1010, 1.442695
        %v1052 = vpow.pop %v1051
        %v1053 = vmul.f32 %v1011, 1.442695
        %v1054 = vpow.pop %v1053
        %v1055 = vmul.f32 %v1012, 1.442695
        %v1056 = vpow.pop %v1055
        %v1057 = vmul.f32 %v1013, 1.442695
        %v1058 = vpow.pop %v1057
        %v1059 = vmul.f32 %v1014, 1.442695
        %v1060 = vpow.pop %v1059
        %v1061 = vmul.f32 %v1015, 1.442695
        %v1062 = vpow.pop %v1061
        %v1063 = vmul.f32 %v1016, 1.442695
        %v1064 = vpow.pop %v1063
        %v1065 = vmul.f32 %v1017, 1.442695
        %v1066 = vpow.pop %v1065
        %v1067 = vmul.f32 %v1018, 1.442695
        %v1068 = vpow.pop %v1067
        %v1069 = vmul.f32 %v1019, 1.442695
        %v1070 = vpow.pop %v1069
        %v1071 = vmul.f32 %v1020, 1.442695
        %v1072 = vpow.pop %v1071
        %v1073 = vmul.f32 %v1021, 1.442695
        %v1074 = vpow.pop %v1073
        %v1075 = vmul.f32 %v1022, 1.442695
        %v1076 = vpow.pop %v1075
        %v1077 = vmul.f32 %v1023, 1.442695
        %v1078 = vpow.pop %v1077
        %v1079 = vmul.f32 %v1024, 1.442695
        %v1080 = vpow.pop %v1079
        %v1081 = vmul.f32 %v1025, 1.442695
        %v1082 = vpow.pop %v1081
        %v1083 = vmul.f32 %v1026, 1.442695
        %v1084 = vpow.pop %v1083
        %v1085 = vmul.f32 %v1027, 1.442695
        %v1086 = vpow.pop %v1085
        %v1087 = vmul.f32 %v1028, 1.442695
        %v1088 = vpow.pop %v1087
        %v1089 = vmul.f32 %v1029, 1.442695
        %v1090 = vpow.pop %v1089
        %v1091 = vmul.f32 %v1030, 1.442695
        %v1092 = vpow.pop %v1091
        %v1093 = vmul.f32 %v1031, 1.442695
        %v1094 = vpow.pop %v1093
        %v1095 = vmul.f32 %v1032, 1.442695
        %v1096 = vpow.pop %v1095
        %v1097 = vadd.f32 %v1034, 1.0
        %v1098 = vadd.f32 %v1036, 1.0
        %v1099 = vadd.f32 %v1038, 1.0
        %v1100 = vadd.f32 %v1040, 1.0
        %v1101 = vadd.f32 %v1042, 1.0
        %v1102 = vadd.f32 %v1044, 1.0
        %v1103 = vadd.f32 %v1046, 1.0
        %v1104 = vadd.f32 %v1048, 1.0
        %v1105 = vadd.f32 %v1050, 1.0
        %v1106 = vadd.f32 %v1052, 1.0
        %v1107 = vadd.f32 %v1054, 1.0
        %v1108 = vadd.f32 %v1056, 1.0
        %v1109 = vadd.f32 %v1058, 1.0
        %v1110 = vadd.f32 %v1060, 1.0
        %v1111 = vadd.f32 %v1062, 1.0
        %v1112 = vadd.f32 %v1064, 1.0
        %v1113 = vadd.f32 %v1066, 1.0
        %v1114 = vadd.f32 %v1068, 1.0
        %v1115 = vadd.f32 %v1070, 1.0
        %v1116 = vadd.f32 %v1072, 1.0
        %v1117 = vadd.f32 %v1074, 1.0
        %v1118 = vadd.f32 %v1076, 1.0
        %v1119 = vadd.f32 %v1078, 1.0
        %v1120 = vadd.f32 %v1080, 1.0
        %v1121 = vadd.f32 %v1082, 1.0
        %v1122 = vadd.f32 %v1084, 1.0
        %v1123 = vadd.f32 %v1086, 1.0
        %v1124 = vadd.f32 %v1088, 1.0
        %v1125 = vadd.f32 %v1090, 1.0
        %v1126 = vadd.f32 %v1092, 1.0
        %v1127 = vadd.f32 %v1094, 1.0
        %v1128 = vadd.f32 %v1096, 1.0
        %v1129 = vrcp.pop %v1097
        %v1130 = vrcp.pop %v1098
        %v1131 = vrcp.pop %v1099
        %v1132 = vrcp.pop %v1100
        %v1133 = vrcp.pop %v1101
        %v1134 = vrcp.pop %v1102
        %v1135 = vrcp.pop %v1103
        %v1136 = vrcp.pop %v1104
        %v1137 = vrcp.pop %v1105
        %v1138 = vrcp.pop %v1106
        %v1139 = vrcp.pop %v1107
        %v1140 = vrcp.pop %v1108
        %v1141 = vrcp.pop %v1109
        %v1142 = vrcp.pop %v1110
        %v1143 = vrcp.pop %v1111
        %v1144 = vrcp.pop %v1112
        %v1145 = vrcp.pop %v1113
        %v1146 = vrcp.pop %v1114
        %v1147 = vrcp.pop %v1115
        %v1148 = vrcp.pop %v1116
        %v1149 = vrcp.pop %v1117
        %v1150 = vrcp.pop %v1118
        %v1151 = vrcp.pop %v1119
        %v1152 = vrcp.pop %v1120
        %v1153 = vrcp.pop %v1121
        %v1154 = vrcp.pop %v1122
        %v1155 = vrcp.pop %v1123
        %v1156 = vrcp.pop %v1124
        %v1157 = vrcp.pop %v1125
        %v1158 = vrcp.pop %v1126
        %v1159 = vrcp.pop %v1127
        %v1160 = vrcp.pop %v1128
        %v1161 = vmul.f32 %v969, %v1129
        %v1162 = vmul.f32 %v970, %v1130
        %v1163 = vmul.f32 %v971, %v1131
        %v1164 = vmul.f32 %v972, %v1132
        %v1165 = vmul.f32 %v973, %v1133
        %v1166 = vmul.f32 %v974, %v1134
        %v1167 = vmul.f32 %v975, %v1135
        %v1168 = vmul.f32 %v976, %v1136
        %v1169 = vmul.f32 %v977, %v1137
        %v1170 = vmul.f32 %v978, %v1138
        %v1171 = vmul.f32 %v979, %v1139
        %v1172 = vmul.f32 %v980, %v1140
        %v1173 = vmul.f32 %v981, %v1141
        %v1174 = vmul.f32 %v982, %v1142
        %v1175 = vmul.f32 %v983, %v1143
        %v1176 = vmul.f32 %v984, %v1144
        %v1177 = vmul.f32 %v985, %v1145
        %v1178 = vmul.f32 %v986, %v1146
        %v1179 = vmul.f32 %v987, %v1147
        %v1180 = vmul.f32 %v988, %v1148
        %v1181 = vmul.f32 %v989, %v1149
        %v1182 = vmul.f32 %v990, %v1150
        %v1183 = vmul.f32 %v991, %v1151
        %v1184 = vmul.f32 %v992, %v1152
        %v1185 = vmul.f32 %v993, %v1153
        %v1186 = vmul.f32 %v994, %v1154
        %v1187 = vmul.f32 %v995, %v1155
        %v1188 = vmul.f32 %v996, %v1156
        %v1189 = vmul.f32 %v997, %v1157
        %v1190 = vmul.f32 %v998, %v1158
        %v1191 = vmul.f32 %v999, %v1159
        %v1192 = vmul.f32 %v1000, %v1160
        %1193 = vst [vmem:[%s239] sm:$0xff] %v1161
        %1194 = vst [vmem:[%s239 + $0x8] sm:$0xff] %v1162
        %1195 = vst [vmem:[%s239 + $0x10] sm:$0xff] %v1163
        %1196 = vst [vmem:[%s239 + $0x18] sm:$0xff] %v1164
        %1197 = vst [vmem:[%s239 + $0x20] sm:$0xff] %v1165
        %1198 = vst [vmem:[%s239 + $0x28] sm:$0xff] %v1166
        %1199 = vst [vmem:[%s239 + $0x30] sm:$0xff] %v1167
        %1200 = vst [vmem:[%s239 + $0x38] sm:$0xff] %v1168
        %1201 = vst [vmem:[%s239 + $0x40] sm:$0xff] %v1169
        %1202 = vst [vmem:[%s239 + $0x48] sm:$0xff] %v1170
        %1203 = vst [vmem:[%s239 + $0x50] sm:$0xff] %v1171
        %1204 = vst [vmem:[%s239 + $0x58] sm:$0xff] %v1172
        %1205 = vst [vmem:[%s239 + $0x60] sm:$0xff] %v1173
        %1206 = vst [vmem:[%s239 + $0x68] sm:$0xff] %v1174
        %1207 = vst [vmem:[%s239 + $0x70] sm:$0xff] %v1175
        %1208 = vst [vmem:[%s239 + $0x78] sm:$0xff] %v1176
        %1209 = vst [vmem:[%s239 + $0x80] sm:$0xff] %v1177
        %1210 = vst [vmem:[%s239 + $0x88] sm:$0xff] %v1178
        %1211 = vst [vmem:[%s239 + $0x90] sm:$0xff] %v1179
        %1212 = vst [vmem:[%s239 + $0x98] sm:$0xff] %v1180
        %1213 = vst [vmem:[%s239 + $0xa0] sm:$0xff] %v1181
        %1214 = vst [vmem:[%s239 + $0xa8] sm:$0xff] %v1182
        %1215 = vst [vmem:[%s239 + $0xb0] sm:$0xff] %v1183
        %1216 = vst [vmem:[%s239 + $0xb8] sm:$0xff] %v1184
        %1217 = vst [vmem:[%s239 + $0xc0] sm:$0xff] %v1185
        %1218 = vst [vmem:[%s239 + $0xc8] sm:$0xff] %v1186
        %1219 = vst [vmem:[%s239 + $0xd0] sm:$0xff] %v1187
        %1220 = vst [vmem:[%s239 + $0xd8] sm:$0xff] %v1188
        %1221 = vst [vmem:[%s239 + $0xe0] sm:$0xff] %v1189
        %1222 = vst [vmem:[%s239 + $0xe8] sm:$0xff] %v1190
        %1223 = vst [vmem:[%s239 + $0xf0] sm:$0xff] %v1191
        %1224 = vst [vmem:[%s239 + $0xf8] sm:$0xff] %v1192
        %v1225 = vld [vmem:[%s244 + $0x80] sm:$0xf]
        %v1226 = vld [vmem:[%s244 + $0x84] sm:$0xf]
        %v1227 = vld [vmem:[%s244 + $0x88] sm:$0xf]
        %v1228 = vld [vmem:[%s244 + $0x8c] sm:$0xf]
        %v1229 = vld [vmem:[%s244 + $0x90] sm:$0xf]
        %v1230 = vld [vmem:[%s244 + $0x94] sm:$0xf]
        %v1231 = vld [vmem:[%s244 + $0x98] sm:$0xf]
        %v1232 = vld [vmem:[%s244 + $0x9c] sm:$0xf]
        %v1233 = vld [vmem:[%s244 + $0xa0] sm:$0xf]
        %v1234 = vld [vmem:[%s244 + $0xa4] sm:$0xf]
        %v1235 = vld [vmem:[%s244 + $0xa8] sm:$0xf]
        %v1236 = vld [vmem:[%s244 + $0xac] sm:$0xf]
        %v1237 = vld [vmem:[%s244 + $0xb0] sm:$0xf]
        %v1238 = vld [vmem:[%s244 + $0xb4] sm:$0xf]
        %v1239 = vld [vmem:[%s244 + $0xb8] sm:$0xf]
        %v1240 = vld [vmem:[%s244 + $0xbc] sm:$0xf]
        %v1241 = vld [vmem:[%s244 + $0xc0] sm:$0xf]
        %v1242 = vld [vmem:[%s244 + $0xc4] sm:$0xf]
        %v1243 = vld [vmem:[%s244 + $0xc8] sm:$0xf]
        %v1244 = vld [vmem:[%s244 + $0xcc] sm:$0xf]
        %v1245 = vld [vmem:[%s244 + $0xd0] sm:$0xf]
        %v1246 = vld [vmem:[%s244 + $0xd4] sm:$0xf]
        %v1247 = vld [vmem:[%s244 + $0xd8] sm:$0xf]
        %v1248 = vld [vmem:[%s244 + $0xdc] sm:$0xf]
        %v1249 = vld [vmem:[%s244 + $0xe0] sm:$0xf]
        %v1250 = vld [vmem:[%s244 + $0xe4] sm:$0xf]
        %v1251 = vld [vmem:[%s244 + $0xe8] sm:$0xf]
        %v1252 = vld [vmem:[%s244 + $0xec] sm:$0xf]
        %v1253 = vld [vmem:[%s244 + $0xf0] sm:$0xf]
        %v1254 = vld [vmem:[%s244 + $0xf4] sm:$0xf]
        %v1255 = vld [vmem:[%s244 + $0xf8] sm:$0xf]
        %v1256 = vld [vmem:[%s244 + $0xfc] sm:$0xf]
        %v1257 = vld [vmem:[%s248] sm:$0xf]
        %v1258 = vld [vmem:[%s248 + $0x4] sm:$0x3]
        %v1259 = vld [vmem:[%s244 + $0x100] sm:$0xf]
        %v1260 = vld [vmem:[%s244 + $0x104] sm:$0xf]
        %v1261 = vld [vmem:[%s244 + $0x108] sm:$0xf]
        %v1262 = vld [vmem:[%s244 + $0x10c] sm:$0xf]
        %v1263 = vld [vmem:[%s296] sm:$0xf]
        %v1264 = vld [vmem:[%s296 + $0x4] sm:$0x3]
        %v1297 = vunpack.c.l.b16 %v1229
        %v1298 = vunpack.c.l.b16 %v1230
        %v1299 = vunpack.c.l.b16 %v1231
        %v1300 = vunpack.c.l.b16 %v1232
        %v1301 = vunpack.c.l.b16 %v1233
        %v1302 = vunpack.c.l.b16 %v1234
        %v1303 = vunpack.c.l.b16 %v1235
        %v1304 = vunpack.c.l.b16 %v1236
        %v1305 = vunpack.c.l.b16 %v1237
        %v1306 = vunpack.c.l.b16 %v1238
        %v1307 = vunpack.c.l.b16 %v1239
        %v1308 = vunpack.c.l.b16 %v1240
        %v1309 = vunpack.c.l.b16 %v1241
        %v1310 = vunpack.c.l.b16 %v1242
        %v1311 = vunpack.c.l.b16 %v1243
        %v1312 = vunpack.c.l.b16 %v1244
        %v1313 = vunpack.c.l.b16 %v1245
        %v1314 = vunpack.c.l.b16 %v1246
        %v1315 = vunpack.c.l.b16 %v1247
        %v1316 = vunpack.c.l.b16 %v1248
        %v1317 = vunpack.c.l.b16 %v1249
        %v1318 = vunpack.c.l.b16 %v1250
        %v1319 = vunpack.c.l.b16 %v1251
        %v1320 = vunpack.c.l.b16 %v1252
        %v1321 = vunpack.c.l.b16 %v1253
        %v1322 = vunpack.c.l.b16 %v1254
        %v1323 = vunpack.c.l.b16 %v1255
        %v1324 = vunpack.c.l.b16 %v1256
        %v1325 = vunpack.c.l.b16 %v1259
        %v1326 = vunpack.c.l.b16 %v1260
        %v1327 = vunpack.c.l.b16 %v1261
        %v1328 = vunpack.c.l.b16 %v1262
        %v1329 = vpack.c.b16 %v1298, %v1297
        %v1330 = vpack.c.b16 %v1300, %v1299
        %v1331 = vpack.c.b16 %v1302, %v1301
        %v1332 = vpack.c.b16 %v1304, %v1303
        %v1333 = vpack.c.b16 %v1306, %v1305
        %v1334 = vpack.c.b16 %v1308, %v1307
        %v1335 = vpack.c.b16 %v1310, %v1309
        %v1336 = vpack.c.b16 %v1312, %v1311
        %v1337 = vpack.c.b16 %v1314, %v1313
        %v1338 = vpack.c.b16 %v1316, %v1315
        %v1339 = vpack.c.b16 %v1318, %v1317
        %v1340 = vpack.c.b16 %v1320, %v1319
        %v1341 = vpack.c.b16 %v1322, %v1321
        %v1342 = vpack.c.b16 %v1324, %v1323
        %v1343 = vpack.c.b16 %v1326, %v1325
        %v1344 = vpack.c.b16 %v1328, %v1327
        %v1347 = vunpack.c.l.b16 %v1263
        %v1348 = vunpack.c.l.b16 %v1264
        %v1349 = vpack.c.b16 %v1348, %v1347
        %v1351 = vsel %vm384, %v1329, 0
        %v1354 = vsel %vm384, %v1330, 0
        %v1357 = vsel %vm384, %v1331, 0
        %v1360 = vsel %vm384, %v1332, 0
        %v1363 = vsel %vm384, %v1333, 0
        %v1366 = vsel %vm384, %v1334, 0
        %v1369 = vsel %vm384, %v1335, 0
        %v1372 = vsel %vm384, %v1336, 0
        %v1375 = vsel %vm384, %v1337, 0
        %v1378 = vsel %vm384, %v1338, 0
        %v1381 = vsel %vm384, %v1339, 0
        %v1384 = vsel %vm384, %v1340, 0
        %v1387 = vsel %vm384, %v1341, 0
        %v1390 = vsel %vm384, %v1342, 0
        %v1393 = vsel %vm384, %v1343, 0
        %v1396 = vsel %vm384, %v1344, 0
        %v1399 = vsel %vm433, %v1349, 0
        %1401 = vmatpush.bf16.msra.mxu0 0
        %1402 = vmatpush.bf16.msra.mxu0 0
        %1403 = vmatpush.bf16.msra.mxu0 0
        %1404 = vmatpush.bf16.msra.mxu0 0
        %1405 = vmatpush.bf16.msra.mxu0 0
        %1406 = vmatpush.bf16.msra.mxu0 0
        %1407 = vmatpush.bf16.msra.mxu0 0
        %1408 = vmatpush.bf16.msra.mxu0 %v1399
        %1409 = vmatmul.bf16.gmra.mxu0 %v1351
        %v1410 = vpop.f32.mrf.mxu0
        %v1411 = vadd.f32 0.0, %v1410
        %v1412 = vpop.f32.mrf.mxu0
        %v1413 = vadd.f32 0.0, %v1412
        %1414 = vmatmul.bf16.gmra.mxu0 %v1354
        %v1415 = vpop.f32.mrf.mxu0
        %v1416 = vadd.f32 0.0, %v1415
        %v1417 = vpop.f32.mrf.mxu0
        %v1418 = vadd.f32 0.0, %v1417
        %1419 = vmatmul.bf16.gmra.mxu0 %v1357
        %v1420 = vpop.f32.mrf.mxu0
        %v1421 = vadd.f32 0.0, %v1420
        %v1422 = vpop.f32.mrf.mxu0
        %v1423 = vadd.f32 0.0, %v1422
        %1424 = vmatmul.bf16.gmra.mxu0 %v1360
        %v1425 = vpop.f32.mrf.mxu0
        %v1426 = vadd.f32 0.0, %v1425
        %v1427 = vpop.f32.mrf.mxu0
        %v1428 = vadd.f32 0.0, %v1427
        %1429 = vmatmul.bf16.gmra.mxu0 %v1363
        %v1430 = vpop.f32.mrf.mxu0
        %v1431 = vadd.f32 0.0, %v1430
        %v1432 = vpop.f32.mrf.mxu0
        %v1433 = vadd.f32 0.0, %v1432
        %1434 = vmatmul.bf16.gmra.mxu0 %v1366
        %v1435 = vpop.f32.mrf.mxu0
        %v1436 = vadd.f32 0.0, %v1435
        %v1437 = vpop.f32.mrf.mxu0
        %v1438 = vadd.f32 0.0, %v1437
        %1439 = vmatmul.bf16.gmra.mxu0 %v1369
        %v1440 = vpop.f32.mrf.mxu0
        %v1441 = vadd.f32 0.0, %v1440
        %v1442 = vpop.f32.mrf.mxu0
        %v1443 = vadd.f32 0.0, %v1442
        %1444 = vmatmul.bf16.gmra.mxu0 %v1372
        %v1445 = vpop.f32.mrf.mxu0
        %v1446 = vadd.f32 0.0, %v1445
        %v1447 = vpop.f32.mrf.mxu0
        %v1448 = vadd.f32 0.0, %v1447
        %1449 = vmatmul.bf16.gmra.mxu0 %v1375
        %v1450 = vpop.f32.mrf.mxu0
        %v1451 = vadd.f32 0.0, %v1450
        %v1452 = vpop.f32.mrf.mxu0
        %v1453 = vadd.f32 0.0, %v1452
        %1454 = vmatmul.bf16.gmra.mxu0 %v1378
        %v1455 = vpop.f32.mrf.mxu0
        %v1456 = vadd.f32 0.0, %v1455
        %v1457 = vpop.f32.mrf.mxu0
        %v1458 = vadd.f32 0.0, %v1457
        %1459 = vmatmul.bf16.gmra.mxu0 %v1381
        %v1460 = vpop.f32.mrf.mxu0
        %v1461 = vadd.f32 0.0, %v1460
        %v1462 = vpop.f32.mrf.mxu0
        %v1463 = vadd.f32 0.0, %v1462
        %1464 = vmatmul.bf16.gmra.mxu0 %v1384
        %v1465 = vpop.f32.mrf.mxu0
        %v1466 = vadd.f32 0.0, %v1465
        %v1467 = vpop.f32.mrf.mxu0
        %v1468 = vadd.f32 0.0, %v1467
        %1469 = vmatmul.bf16.gmra.mxu0 %v1387
        %v1470 = vpop.f32.mrf.mxu0
        %v1471 = vadd.f32 0.0, %v1470
        %v1472 = vpop.f32.mrf.mxu0
        %v1473 = vadd.f32 0.0, %v1472
        %1474 = vmatmul.bf16.gmra.mxu0 %v1390
        %v1475 = vpop.f32.mrf.mxu0
        %v1476 = vadd.f32 0.0, %v1475
        %v1477 = vpop.f32.mrf.mxu0
        %v1478 = vadd.f32 0.0, %v1477
        %1479 = vmatmul.bf16.gmra.mxu0 %v1393
        %v1480 = vpop.f32.mrf.mxu0
        %v1481 = vadd.f32 0.0, %v1480
        %v1482 = vpop.f32.mrf.mxu0
        %v1483 = vadd.f32 0.0, %v1482
        %1484 = vmatmul.bf16.gmra.mxu0 %v1396
        %v1485 = vpop.f32.mrf.mxu0
        %v1486 = vadd.f32 0.0, %v1485
        %v1487 = vpop.f32.mrf.mxu0
        %v1488 = vadd.f32 0.0, %v1487
        %1489 = vdwg.mxu0
        %v1494 = vunpack.c.l.b16 %v1225
        %v1495 = vunpack.c.l.b16 %v1226
        %v1496 = vunpack.c.l.b16 %v1227
        %v1497 = vunpack.c.l.b16 %v1228
        %v1498 = vpack.c.b16 %v1495, %v1494
        %v1499 = vpack.c.b16 %v1497, %v1496
        %v1502 = vunpack.c.l.b16 %v1257
        %v1503 = vunpack.c.l.b16 %v1258
        %v1504 = vpack.c.b16 %v1503, %v1502
        %v1506 = vsel %vm384, %v1498, 0
        %v1509 = vsel %vm384, %v1499, 0
        %v1512 = vsel %vm433, %v1504, 0
        %1514 = vmatpush.bf16.msra.mxu0 0
        %1515 = vmatpush.bf16.msra.mxu0 0
        %1516 = vmatpush.bf16.msra.mxu0 0
        %1517 = vmatpush.bf16.msra.mxu0 0
        %1518 = vmatpush.bf16.msra.mxu0 0
        %1519 = vmatpush.bf16.msra.mxu0 0
        %1520 = vmatpush.bf16.msra.mxu0 0
        %1521 = vmatpush.bf16.msra.mxu0 %v1512
        %1522 = vmatmul.bf16.gmra.mxu0 %v1506
        %v1523 = vpop.f32.mrf.mxu0
        %v1524 = vadd.f32 %v1411, %v1523
        %v1525 = vpop.f32.mrf.mxu0
        %v1526 = vadd.f32 %v1413, %v1525
        %1527 = vmatmul.bf16.gmra.mxu0 %v1509
        %v1528 = vpop.f32.mrf.mxu0
        %v1529 = vadd.f32 %v1416, %v1528
        %v1530 = vpop.f32.mrf.mxu0
        %v1531 = vadd.f32 %v1418, %v1530
        %1532 = vmatmul.bf16.gmra.mxu0 %v1351
        %v1533 = vpop.f32.mrf.mxu0
        %v1534 = vadd.f32 %v1421, %v1533
        %v1535 = vpop.f32.mrf.mxu0
        %v1536 = vadd.f32 %v1423, %v1535
        %1537 = vmatmul.bf16.gmra.mxu0 %v1354
        %v1538 = vpop.f32.mrf.mxu0
        %v1539 = vadd.f32 %v1426, %v1538
        %v1540 = vpop.f32.mrf.mxu0
        %v1541 = vadd.f32 %v1428, %v1540
        %1542 = vmatmul.bf16.gmra.mxu0 %v1357
        %v1543 = vpop.f32.mrf.mxu0
        %v1544 = vadd.f32 %v1431, %v1543
        %v1545 = vpop.f32.mrf.mxu0
        %v1546 = vadd.f32 %v1433, %v1545
        %1547 = vmatmul.bf16.gmra.mxu0 %v1360
        %v1548 = vpop.f32.mrf.mxu0
        %v1549 = vadd.f32 %v1436, %v1548
        %v1550 = vpop.f32.mrf.mxu0
        %v1551 = vadd.f32 %v1438, %v1550
        %1552 = vmatmul.bf16.gmra.mxu0 %v1363
        %v1553 = vpop.f32.mrf.mxu0
        %v1554 = vadd.f32 %v1441, %v1553
        %v1555 = vpop.f32.mrf.mxu0
        %v1556 = vadd.f32 %v1443, %v1555
        %1557 = vmatmul.bf16.gmra.mxu0 %v1366
        %v1558 = vpop.f32.mrf.mxu0
        %v1559 = vadd.f32 %v1446, %v1558
        %v1560 = vpop.f32.mrf.mxu0
        %v1561 = vadd.f32 %v1448, %v1560
        %1562 = vmatmul.bf16.gmra.mxu0 %v1369
        %v1563 = vpop.f32.mrf.mxu0
        %v1564 = vadd.f32 %v1451, %v1563
        %v1565 = vpop.f32.mrf.mxu0
        %v1566 = vadd.f32 %v1453, %v1565
        %1567 = vmatmul.bf16.gmra.mxu0 %v1372
        %v1568 = vpop.f32.mrf.mxu0
        %v1569 = vadd.f32 %v1456, %v1568
        %v1570 = vpop.f32.mrf.mxu0
        %v1571 = vadd.f32 %v1458, %v1570
        %1572 = vmatmul.bf16.gmra.mxu0 %v1375
        %v1573 = vpop.f32.mrf.mxu0
        %v1574 = vadd.f32 %v1461, %v1573
        %v1575 = vpop.f32.mrf.mxu0
        %v1576 = vadd.f32 %v1463, %v1575
        %1577 = vmatmul.bf16.gmra.mxu0 %v1378
        %v1578 = vpop.f32.mrf.mxu0
        %v1579 = vadd.f32 %v1466, %v1578
        %v1580 = vpop.f32.mrf.mxu0
        %v1581 = vadd.f32 %v1468, %v1580
        %1582 = vmatmul.bf16.gmra.mxu0 %v1381
        %v1583 = vpop.f32.mrf.mxu0
        %v1584 = vadd.f32 %v1471, %v1583
        %v1585 = vpop.f32.mrf.mxu0
        %v1586 = vadd.f32 %v1473, %v1585
        %1587 = vmatmul.bf16.gmra.mxu0 %v1384
        %v1588 = vpop.f32.mrf.mxu0
        %v1589 = vadd.f32 %v1476, %v1588
        %v1590 = vpop.f32.mrf.mxu0
        %v1591 = vadd.f32 %v1478, %v1590
        %1592 = vmatmul.bf16.gmra.mxu0 %v1387
        %v1593 = vpop.f32.mrf.mxu0
        %v1594 = vadd.f32 %v1481, %v1593
        %v1595 = vpop.f32.mrf.mxu0
        %v1596 = vadd.f32 %v1483, %v1595
        %1597 = vmatmul.bf16.gmra.mxu0 %v1390
        %v1598 = vpop.f32.mrf.mxu0
        %v1599 = vadd.f32 %v1486, %v1598
        %v1600 = vpop.f32.mrf.mxu0
        %v1601 = vadd.f32 %v1488, %v1600
        %1602 = vdwg.mxu0
        %v1603 = vld [vmem:[%s244 + $0xa0] sm:$0xf]
        %v1604 = vld [vmem:[%s244 + $0xa4] sm:$0xf]
        %v1605 = vld [vmem:[%s244 + $0xa8] sm:$0xf]
        %v1606 = vld [vmem:[%s244 + $0xac] sm:$0xf]
        %v1607 = vld [vmem:[%s244 + $0xb0] sm:$0xf]
        %v1608 = vld [vmem:[%s244 + $0xb4] sm:$0xf]
        %v1609 = vld [vmem:[%s244 + $0xb8] sm:$0xf]
        %v1610 = vld [vmem:[%s244 + $0xbc] sm:$0xf]
        %v1611 = vld [vmem:[%s244 + $0xc0] sm:$0xf]
        %v1612 = vld [vmem:[%s244 + $0xc4] sm:$0xf]
        %v1613 = vld [vmem:[%s244 + $0xc8] sm:$0xf]
        %v1614 = vld [vmem:[%s244 + $0xcc] sm:$0xf]
        %v1615 = vld [vmem:[%s244 + $0xd0] sm:$0xf]
        %v1616 = vld [vmem:[%s244 + $0xd4] sm:$0xf]
        %v1617 = vld [vmem:[%s244 + $0xd8] sm:$0xf]
        %v1618 = vld [vmem:[%s244 + $0xdc] sm:$0xf]
        %v1619 = vld [vmem:[%s244 + $0xe0] sm:$0xf]
        %v1620 = vld [vmem:[%s244 + $0xe4] sm:$0xf]
        %v1621 = vld [vmem:[%s244 + $0xe8] sm:$0xf]
        %v1622 = vld [vmem:[%s244 + $0xec] sm:$0xf]
        %v1623 = vld [vmem:[%s244 + $0xf0] sm:$0xf]
        %v1624 = vld [vmem:[%s244 + $0xf4] sm:$0xf]
        %v1625 = vld [vmem:[%s244 + $0xf8] sm:$0xf]
        %v1626 = vld [vmem:[%s244 + $0xfc] sm:$0xf]
        %v1627 = vld [vmem:[%s244 + $0x100] sm:$0xf]
        %v1628 = vld [vmem:[%s244 + $0x104] sm:$0xf]
        %v1629 = vld [vmem:[%s244 + $0x108] sm:$0xf]
        %v1630 = vld [vmem:[%s244 + $0x10c] sm:$0xf]
        %v1631 = vld [vmem:[%s244 + $0x110] sm:$0xf]
        %v1632 = vld [vmem:[%s244 + $0x114] sm:$0xf]
        %v1633 = vld [vmem:[%s244 + $0x118] sm:$0xf]
        %v1634 = vld [vmem:[%s244 + $0x11c] sm:$0xf]
        %v1635 = vld [vmem:[%s671] sm:$0xf]
        %v1636 = vld [vmem:[%s671 + $0x4] sm:$0x3]
        %v1669 = vunpack.c.l.b16 %v1603
        %v1670 = vunpack.c.l.b16 %v1604
        %v1671 = vunpack.c.l.b16 %v1605
        %v1672 = vunpack.c.l.b16 %v1606
        %v1673 = vunpack.c.l.b16 %v1607
        %v1674 = vunpack.c.l.b16 %v1608
        %v1675 = vunpack.c.l.b16 %v1609
        %v1676 = vunpack.c.l.b16 %v1610
        %v1677 = vunpack.c.l.b16 %v1611
        %v1678 = vunpack.c.l.b16 %v1612
        %v1679 = vunpack.c.l.b16 %v1613
        %v1680 = vunpack.c.l.b16 %v1614
        %v1681 = vunpack.c.l.b16 %v1615
        %v1682 = vunpack.c.l.b16 %v1616
        %v1683 = vunpack.c.l.b16 %v1617
        %v1684 = vunpack.c.l.b16 %v1618
        %v1685 = vunpack.c.l.b16 %v1619
        %v1686 = vunpack.c.l.b16 %v1620
        %v1687 = vunpack.c.l.b16 %v1621
        %v1688 = vunpack.c.l.b16 %v1622
        %v1689 = vunpack.c.l.b16 %v1623
        %v1690 = vunpack.c.l.b16 %v1624
        %v1691 = vunpack.c.l.b16 %v1625
        %v1692 = vunpack.c.l.b16 %v1626
        %v1693 = vunpack.c.l.b16 %v1627
        %v1694 = vunpack.c.l.b16 %v1628
        %v1695 = vunpack.c.l.b16 %v1629
        %v1696 = vunpack.c.l.b16 %v1630
        %v1697 = vunpack.c.l.b16 %v1631
        %v1698 = vunpack.c.l.b16 %v1632
        %v1699 = vunpack.c.l.b16 %v1633
        %v1700 = vunpack.c.l.b16 %v1634
        %v1701 = vpack.c.b16 %v1670, %v1669
        %v1702 = vpack.c.b16 %v1672, %v1671
        %v1703 = vpack.c.b16 %v1674, %v1673
        %v1704 = vpack.c.b16 %v1676, %v1675
        %v1705 = vpack.c.b16 %v1678, %v1677
        %v1706 = vpack.c.b16 %v1680, %v1679
        %v1707 = vpack.c.b16 %v1682, %v1681
        %v1708 = vpack.c.b16 %v1684, %v1683
        %v1709 = vpack.c.b16 %v1686, %v1685
        %v1710 = vpack.c.b16 %v1688, %v1687
        %v1711 = vpack.c.b16 %v1690, %v1689
        %v1712 = vpack.c.b16 %v1692, %v1691
        %v1713 = vpack.c.b16 %v1694, %v1693
        %v1714 = vpack.c.b16 %v1696, %v1695
        %v1715 = vpack.c.b16 %v1698, %v1697
        %v1716 = vpack.c.b16 %v1700, %v1699
        %v1719 = vunpack.c.l.b16 %v1635
        %v1720 = vunpack.c.l.b16 %v1636
        %v1721 = vpack.c.b16 %v1720, %v1719
        %v1723 = vsel %vm384, %v1701, 0
        %v1726 = vsel %vm384, %v1702, 0
        %v1729 = vsel %vm384, %v1703, 0
        %v1732 = vsel %vm384, %v1704, 0
        %v1735 = vsel %vm384, %v1705, 0
        %v1738 = vsel %vm384, %v1706, 0
        %v1741 = vsel %vm384, %v1707, 0
        %v1744 = vsel %vm384, %v1708, 0
        %v1747 = vsel %vm384, %v1709, 0
        %v1750 = vsel %vm384, %v1710, 0
        %v1753 = vsel %vm384, %v1711, 0
        %v1756 = vsel %vm384, %v1712, 0
        %v1759 = vsel %vm384, %v1713, 0
        %v1762 = vsel %vm384, %v1714, 0
        %v1765 = vsel %vm384, %v1715, 0
        %v1768 = vsel %vm384, %v1716, 0
        %v1771 = vsel %vm433, %v1721, 0
        %1773 = vmatpush.bf16.msra.mxu0 0
        %1774 = vmatpush.bf16.msra.mxu0 0
        %1775 = vmatpush.bf16.msra.mxu0 0
        %1776 = vmatpush.bf16.msra.mxu0 0
        %1777 = vmatpush.bf16.msra.mxu0 0
        %1778 = vmatpush.bf16.msra.mxu0 0
        %1779 = vmatpush.bf16.msra.mxu0 0
        %1780 = vmatpush.bf16.msra.mxu0 %v1771
        %1781 = vmatmul.bf16.gmra.mxu0 %v1723
        %v1782 = vpop.f32.mrf.mxu0
        %v1783 = vadd.f32 0.0, %v1782
        %v1784 = vpop.f32.mrf.mxu0
        %v1785 = vadd.f32 0.0, %v1784
        %1786 = vmatmul.bf16.gmra.mxu0 %v1726
        %v1787 = vpop.f32.mrf.mxu0
        %v1788 = vadd.f32 0.0, %v1787
        %v1789 = vpop.f32.mrf.mxu0
        %v1790 = vadd.f32 0.0, %v1789
        %1791 = vmatmul.bf16.gmra.mxu0 %v1729
        %v1792 = vpop.f32.mrf.mxu0
        %v1793 = vadd.f32 0.0, %v1792
        %v1794 = vpop.f32.mrf.mxu0
        %v1795 = vadd.f32 0.0, %v1794
        %1796 = vmatmul.bf16.gmra.mxu0 %v1732
        %v1797 = vpop.f32.mrf.mxu0
        %v1798 = vadd.f32 0.0, %v1797
        %v1799 = vpop.f32.mrf.mxu0
        %v1800 = vadd.f32 0.0, %v1799
        %1801 = vmatmul.bf16.gmra.mxu0 %v1735
        %v1802 = vpop.f32.mrf.mxu0
        %v1803 = vadd.f32 0.0, %v1802
        %v1804 = vpop.f32.mrf.mxu0
        %v1805 = vadd.f32 0.0, %v1804
        %1806 = vmatmul.bf16.gmra.mxu0 %v1738
        %v1807 = vpop.f32.mrf.mxu0
        %v1808 = vadd.f32 0.0, %v1807
        %v1809 = vpop.f32.mrf.mxu0
        %v1810 = vadd.f32 0.0, %v1809
        %1811 = vmatmul.bf16.gmra.mxu0 %v1741
        %v1812 = vpop.f32.mrf.mxu0
        %v1813 = vadd.f32 0.0, %v1812
        %v1814 = vpop.f32.mrf.mxu0
        %v1815 = vadd.f32 0.0, %v1814
        %1816 = vmatmul.bf16.gmra.mxu0 %v1744
        %v1817 = vpop.f32.mrf.mxu0
        %v1818 = vadd.f32 0.0, %v1817
        %v1819 = vpop.f32.mrf.mxu0
        %v1820 = vadd.f32 0.0, %v1819
        %1821 = vmatmul.bf16.gmra.mxu0 %v1747
        %v1822 = vpop.f32.mrf.mxu0
        %v1823 = vadd.f32 0.0, %v1822
        %v1824 = vpop.f32.mrf.mxu0
        %v1825 = vadd.f32 0.0, %v1824
        %1826 = vmatmul.bf16.gmra.mxu0 %v1750
        %v1827 = vpop.f32.mrf.mxu0
        %v1828 = vadd.f32 0.0, %v1827
        %v1829 = vpop.f32.mrf.mxu0
        %v1830 = vadd.f32 0.0, %v1829
        %1831 = vmatmul.bf16.gmra.mxu0 %v1753
        %v1832 = vpop.f32.mrf.mxu0
        %v1833 = vadd.f32 0.0, %v1832
        %v1834 = vpop.f32.mrf.mxu0
        %v1835 = vadd.f32 0.0, %v1834
        %1836 = vmatmul.bf16.gmra.mxu0 %v1756
        %v1837 = vpop.f32.mrf.mxu0
        %v1838 = vadd.f32 0.0, %v1837
        %v1839 = vpop.f32.mrf.mxu0
        %v1840 = vadd.f32 0.0, %v1839
        %1841 = vmatmul.bf16.gmra.mxu0 %v1759
        %v1842 = vpop.f32.mrf.mxu0
        %v1843 = vadd.f32 0.0, %v1842
        %v1844 = vpop.f32.mrf.mxu0
        %v1845 = vadd.f32 0.0, %v1844
        %1846 = vmatmul.bf16.gmra.mxu0 %v1762
        %v1847 = vpop.f32.mrf.mxu0
        %v1848 = vadd.f32 0.0, %v1847
        %v1849 = vpop.f32.mrf.mxu0
        %v1850 = vadd.f32 0.0, %v1849
        %1851 = vmatmul.bf16.gmra.mxu0 %v1765
        %v1852 = vpop.f32.mrf.mxu0
        %v1853 = vadd.f32 0.0, %v1852
        %v1854 = vpop.f32.mrf.mxu0
        %v1855 = vadd.f32 0.0, %v1854
        %1856 = vmatmul.bf16.gmra.mxu0 %v1768
        %v1857 = vpop.f32.mrf.mxu0
        %v1858 = vadd.f32 0.0, %v1857
        %v1859 = vpop.f32.mrf.mxu0
        %v1860 = vadd.f32 0.0, %v1859
        %1861 = vdwg.mxu0
        %v1862 = vadd.f32 %v1524, %v1783
        %v1863 = vadd.f32 %v1526, %v1785
        %v1864 = vadd.f32 %v1529, %v1788
        %v1865 = vadd.f32 %v1531, %v1790
        %v1866 = vadd.f32 %v1534, %v1793
        %v1867 = vadd.f32 %v1536, %v1795
        %v1868 = vadd.f32 %v1539, %v1798
        %v1869 = vadd.f32 %v1541, %v1800
        %v1870 = vadd.f32 %v1544, %v1803
        %v1871 = vadd.f32 %v1546, %v1805
        %v1872 = vadd.f32 %v1549, %v1808
        %v1873 = vadd.f32 %v1551, %v1810
        %v1874 = vadd.f32 %v1554, %v1813
        %v1875 = vadd.f32 %v1556, %v1815
        %v1876 = vadd.f32 %v1559, %v1818
        %v1877 = vadd.f32 %v1561, %v1820
        %v1878 = vadd.f32 %v1564, %v1823
        %v1879 = vadd.f32 %v1566, %v1825
        %v1880 = vadd.f32 %v1569, %v1828
        %v1881 = vadd.f32 %v1571, %v1830
        %v1882 = vadd.f32 %v1574, %v1833
        %v1883 = vadd.f32 %v1576, %v1835
        %v1884 = vadd.f32 %v1579, %v1838
        %v1885 = vadd.f32 %v1581, %v1840
        %v1886 = vadd.f32 %v1584, %v1843
        %v1887 = vadd.f32 %v1586, %v1845
        %v1888 = vadd.f32 %v1589, %v1848
        %v1889 = vadd.f32 %v1591, %v1850
        %v1890 = vadd.f32 %v1594, %v1853
        %v1891 = vadd.f32 %v1596, %v1855
        %v1892 = vadd.f32 %v1599, %v1858
        %v1893 = vadd.f32 %v1601, %v1860
        %v1894 = vmul.f32 %v1862, %v932
        %v1895 = vmul.f32 %v1863, %v932
        %v1896 = vmul.f32 %v1864, %v932
        %v1897 = vmul.f32 %v1865, %v932
        %v1898 = vmul.f32 %v1866, %v932
        %v1899 = vmul.f32 %v1867, %v932
        %v1900 = vmul.f32 %v1868, %v932
        %v1901 = vmul.f32 %v1869, %v932
        %v1902 = vmul.f32 %v1870, %v932
        %v1903 = vmul.f32 %v1871, %v932
        %v1904 = vmul.f32 %v1872, %v932
        %v1905 = vmul.f32 %v1873, %v932
        %v1906 = vmul.f32 %v1874, %v932
        %v1907 = vmul.f32 %v1875, %v932
        %v1908 = vmul.f32 %v1876, %v932
        %v1909 = vmul.f32 %v1877, %v932
        %v1910 = vmul.f32 %v1878, %v932
        %v1911 = vmul.f32 %v1879, %v932
        %v1912 = vmul.f32 %v1880, %v932
        %v1913 = vmul.f32 %v1881, %v932
        %v1914 = vmul.f32 %v1882, %v932
        %v1915 = vmul.f32 %v1883, %v932
        %v1916 = vmul.f32 %v1884, %v932
        %v1917 = vmul.f32 %v1885, %v932
        %v1918 = vmul.f32 %v1886, %v932
        %v1919 = vmul.f32 %v1887, %v932
        %v1920 = vmul.f32 %v1888, %v932
        %v1921 = vmul.f32 %v1889, %v932
        %v1922 = vmul.f32 %v1890, %v932
        %v1923 = vmul.f32 %v1891, %v932
        %v1924 = vmul.f32 %v1892, %v932
        %v1925 = vmul.f32 %v1893, %v932
        %v1926 = vadd.f32 %v1894, %v967
        %v1927 = vadd.f32 %v1895, %v967
        %v1928 = vadd.f32 %v1896, %v967
        %v1929 = vadd.f32 %v1897, %v967
        %v1930 = vadd.f32 %v1898, %v967
        %v1931 = vadd.f32 %v1899, %v967
        %v1932 = vadd.f32 %v1900, %v967
        %v1933 = vadd.f32 %v1901, %v967
        %v1934 = vadd.f32 %v1902, %v967
        %v1935 = vadd.f32 %v1903, %v967
        %v1936 = vadd.f32 %v1904, %v967
        %v1937 = vadd.f32 %v1905, %v967
        %v1938 = vadd.f32 %v1906, %v967
        %v1939 = vadd.f32 %v1907, %v967
        %v1940 = vadd.f32 %v1908, %v967
        %v1941 = vadd.f32 %v1909, %v967
        %v1942 = vadd.f32 %v1910, %v967
        %v1943 = vadd.f32 %v1911, %v967
        %v1944 = vadd.f32 %v1912, %v967
        %v1945 = vadd.f32 %v1913, %v967
        %v1946 = vadd.f32 %v1914, %v967
        %v1947 = vadd.f32 %v1915, %v967
        %v1948 = vadd.f32 %v1916, %v967
        %v1949 = vadd.f32 %v1917, %v967
        %v1950 = vadd.f32 %v1918, %v967
        %v1951 = vadd.f32 %v1919, %v967
        %v1952 = vadd.f32 %v1920, %v967
        %v1953 = vadd.f32 %v1921, %v967
        %v1954 = vadd.f32 %v1922, %v967
        %v1955 = vadd.f32 %v1923, %v967
        %v1956 = vadd.f32 %v1924, %v967
        %v1957 = vadd.f32 %v1925, %v967
        %v1958 = vsub.f32 0.0, %v1926
        %v1959 = vsub.f32 0.0, %v1927
        %v1960 = vsub.f32 0.0, %v1928
        %v1961 = vsub.f32 0.0, %v1929
        %v1962 = vsub.f32 0.0, %v1930
        %v1963 = vsub.f32 0.0, %v1931
        %v1964 = vsub.f32 0.0, %v1932
        %v1965 = vsub.f32 0.0, %v1933
        %v1966 = vsub.f32 0.0, %v1934
        %v1967 = vsub.f32 0.0, %v1935
        %v1968 = vsub.f32 0.0, %v1936
        %v1969 = vsub.f32 0.0, %v1937
        %v1970 = vsub.f32 0.0, %v1938
        %v1971 = vsub.f32 0.0, %v1939
        %v1972 = vsub.f32 0.0, %v1940
        %v1973 = vsub.f32 0.0, %v1941
        %v1974 = vsub.f32 0.0, %v1942
        %v1975 = vsub.f32 0.0, %v1943
        %v1976 = vsub.f32 0.0, %v1944
        %v1977 = vsub.f32 0.0, %v1945
        %v1978 = vsub.f32 0.0, %v1946
        %v1979 = vsub.f32 0.0, %v1947
        %v1980 = vsub.f32 0.0, %v1948
        %v1981 = vsub.f32 0.0, %v1949
        %v1982 = vsub.f32 0.0, %v1950
        %v1983 = vsub.f32 0.0, %v1951
        %v1984 = vsub.f32 0.0, %v1952
        %v1985 = vsub.f32 0.0, %v1953
        %v1986 = vsub.f32 0.0, %v1954
        %v1987 = vsub.f32 0.0, %v1955
        %v1988 = vsub.f32 0.0, %v1956
        %v1989 = vsub.f32 0.0, %v1957
        %v1990 = vmul.f32 %v1958, 1.442695
        %v1991 = vpow.pop %v1990
        %v1992 = vmul.f32 %v1959, 1.442695
        %v1993 = vpow.pop %v1992
        %v1994 = vmul.f32 %v1960, 1.442695
        %v1995 = vpow.pop %v1994
        %v1996 = vmul.f32 %v1961, 1.442695
        %v1997 = vpow.pop %v1996
        %v1998 = vmul.f32 %v1962, 1.442695
        %v1999 = vpow.pop %v1998
        %v2000 = vmul.f32 %v1963, 1.442695
        %v2001 = vpow.pop %v2000
        %v2002 = vmul.f32 %v1964, 1.442695
        %v2003 = vpow.pop %v2002
        %v2004 = vmul.f32 %v1965, 1.442695
        %v2005 = vpow.pop %v2004
        %v2006 = vmul.f32 %v1966, 1.442695
        %v2007 = vpow.pop %v2006
        %v2008 = vmul.f32 %v1967, 1.442695
        %v2009 = vpow.pop %v2008
        %v2010 = vmul.f32 %v1968, 1.442695
        %v2011 = vpow.pop %v2010
        %v2012 = vmul.f32 %v1969, 1.442695
        %v2013 = vpow.pop %v2012
        %v2014 = vmul.f32 %v1970, 1.442695
        %v2015 = vpow.pop %v2014
        %v2016 = vmul.f32 %v1971, 1.442695
        %v2017 = vpow.pop %v2016
        %v2018 = vmul.f32 %v1972, 1.442695
        %v2019 = vpow.pop %v2018
        %v2020 = vmul.f32 %v1973, 1.442695
        %v2021 = vpow.pop %v2020
        %v2022 = vmul.f32 %v1974, 1.442695
        %v2023 = vpow.pop %v2022
        %v2024 = vmul.f32 %v1975, 1.442695
        %v2025 = vpow.pop %v2024
        %v2026 = vmul.f32 %v1976, 1.442695
        %v2027 = vpow.pop %v2026
        %v2028 = vmul.f32 %v1977, 1.442695
        %v2029 = vpow.pop %v2028
        %v2030 = vmul.f32 %v1978, 1.442695
        %v2031 = vpow.pop %v2030
        %v2032 = vmul.f32 %v1979, 1.442695
        %v2033 = vpow.pop %v2032
        %v2034 = vmul.f32 %v1980, 1.442695
        %v2035 = vpow.pop %v2034
        %v2036 = vmul.f32 %v1981, 1.442695
        %v2037 = vpow.pop %v2036
        %v2038 = vmul.f32 %v1982, 1.442695
        %v2039 = vpow.pop %v2038
        %v2040 = vmul.f32 %v1983, 1.442695
        %v2041 = vpow.pop %v2040
        %v2042 = vmul.f32 %v1984, 1.442695
        %v2043 = vpow.pop %v2042
        %v2044 = vmul.f32 %v1985, 1.442695
        %v2045 = vpow.pop %v2044
        %v2046 = vmul.f32 %v1986, 1.442695
        %v2047 = vpow.pop %v2046
        %v2048 = vmul.f32 %v1987, 1.442695
        %v2049 = vpow.pop %v2048
        %v2050 = vmul.f32 %v1988, 1.442695
        %v2051 = vpow.pop %v2050
        %v2052 = vmul.f32 %v1989, 1.442695
        %v2053 = vpow.pop %v2052
        %v2054 = vadd.f32 %v1991, 1.0
        %v2055 = vadd.f32 %v1993, 1.0
        %v2056 = vadd.f32 %v1995, 1.0
        %v2057 = vadd.f32 %v1997, 1.0
        %v2058 = vadd.f32 %v1999, 1.0
        %v2059 = vadd.f32 %v2001, 1.0
        %v2060 = vadd.f32 %v2003, 1.0
        %v2061 = vadd.f32 %v2005, 1.0
        %v2062 = vadd.f32 %v2007, 1.0
        %v2063 = vadd.f32 %v2009, 1.0
        %v2064 = vadd.f32 %v2011, 1.0
        %v2065 = vadd.f32 %v2013, 1.0
        %v2066 = vadd.f32 %v2015, 1.0
        %v2067 = vadd.f32 %v2017, 1.0
        %v2068 = vadd.f32 %v2019, 1.0
        %v2069 = vadd.f32 %v2021, 1.0
        %v2070 = vadd.f32 %v2023, 1.0
        %v2071 = vadd.f32 %v2025, 1.0
        %v2072 = vadd.f32 %v2027, 1.0
        %v2073 = vadd.f32 %v2029, 1.0
        %v2074 = vadd.f32 %v2031, 1.0
        %v2075 = vadd.f32 %v2033, 1.0
        %v2076 = vadd.f32 %v2035, 1.0
        %v2077 = vadd.f32 %v2037, 1.0
        %v2078 = vadd.f32 %v2039, 1.0
        %v2079 = vadd.f32 %v2041, 1.0
        %v2080 = vadd.f32 %v2043, 1.0
        %v2081 = vadd.f32 %v2045, 1.0
        %v2082 = vadd.f32 %v2047, 1.0
        %v2083 = vadd.f32 %v2049, 1.0
        %v2084 = vadd.f32 %v2051, 1.0
        %v2085 = vadd.f32 %v2053, 1.0
        %v2086 = vrcp.pop %v2054
        %v2087 = vrcp.pop %v2055
        %v2088 = vrcp.pop %v2056
        %v2089 = vrcp.pop %v2057
        %v2090 = vrcp.pop %v2058
        %v2091 = vrcp.pop %v2059
        %v2092 = vrcp.pop %v2060
        %v2093 = vrcp.pop %v2061
        %v2094 = vrcp.pop %v2062
        %v2095 = vrcp.pop %v2063
        %v2096 = vrcp.pop %v2064
        %v2097 = vrcp.pop %v2065
        %v2098 = vrcp.pop %v2066
        %v2099 = vrcp.pop %v2067
        %v2100 = vrcp.pop %v2068
        %v2101 = vrcp.pop %v2069
        %v2102 = vrcp.pop %v2070
        %v2103 = vrcp.pop %v2071
        %v2104 = vrcp.pop %v2072
        %v2105 = vrcp.pop %v2073
        %v2106 = vrcp.pop %v2074
        %v2107 = vrcp.pop %v2075
        %v2108 = vrcp.pop %v2076
        %v2109 = vrcp.pop %v2077
        %v2110 = vrcp.pop %v2078
        %v2111 = vrcp.pop %v2079
        %v2112 = vrcp.pop %v2080
        %v2113 = vrcp.pop %v2081
        %v2114 = vrcp.pop %v2082
        %v2115 = vrcp.pop %v2083
        %v2116 = vrcp.pop %v2084
        %v2117 = vrcp.pop %v2085
        %v2118 = vmul.f32 %v1926, %v2086
        %v2119 = vmul.f32 %v1927, %v2087
        %v2120 = vmul.f32 %v1928, %v2088
        %v2121 = vmul.f32 %v1929, %v2089
        %v2122 = vmul.f32 %v1930, %v2090
        %v2123 = vmul.f32 %v1931, %v2091
        %v2124 = vmul.f32 %v1932, %v2092
        %v2125 = vmul.f32 %v1933, %v2093
        %v2126 = vmul.f32 %v1934, %v2094
        %v2127 = vmul.f32 %v1935, %v2095
        %v2128 = vmul.f32 %v1936, %v2096
        %v2129 = vmul.f32 %v1937, %v2097
        %v2130 = vmul.f32 %v1938, %v2098
        %v2131 = vmul.f32 %v1939, %v2099
        %v2132 = vmul.f32 %v1940, %v2100
        %v2133 = vmul.f32 %v1941, %v2101
        %v2134 = vmul.f32 %v1942, %v2102
        %v2135 = vmul.f32 %v1943, %v2103
        %v2136 = vmul.f32 %v1944, %v2104
        %v2137 = vmul.f32 %v1945, %v2105
        %v2138 = vmul.f32 %v1946, %v2106
        %v2139 = vmul.f32 %v1947, %v2107
        %v2140 = vmul.f32 %v1948, %v2108
        %v2141 = vmul.f32 %v1949, %v2109
        %v2142 = vmul.f32 %v1950, %v2110
        %v2143 = vmul.f32 %v1951, %v2111
        %v2144 = vmul.f32 %v1952, %v2112
        %v2145 = vmul.f32 %v1953, %v2113
        %v2146 = vmul.f32 %v1954, %v2114
        %v2147 = vmul.f32 %v1955, %v2115
        %v2148 = vmul.f32 %v1956, %v2116
        %v2149 = vmul.f32 %v1957, %v2117
        %2150 = vst [vmem:[%s239 + $0x100] sm:$0xff] %v2118
        %2151 = vst [vmem:[%s239 + $0x108] sm:$0xff] %v2119
        %2152 = vst [vmem:[%s239 + $0x110] sm:$0xff] %v2120
        %2153 = vst [vmem:[%s239 + $0x118] sm:$0xff] %v2121
        %2154 = vst [vmem:[%s239 + $0x120] sm:$0xff] %v2122
        %2155 = vst [vmem:[%s239 + $0x128] sm:$0xff] %v2123
        %2156 = vst [vmem:[%s239 + $0x130] sm:$0xff] %v2124
        %2157 = vst [vmem:[%s239 + $0x138] sm:$0xff] %v2125
        %2158 = vst [vmem:[%s239 + $0x140] sm:$0xff] %v2126
        %2159 = vst [vmem:[%s239 + $0x148] sm:$0xff] %v2127
        %2160 = vst [vmem:[%s239 + $0x150] sm:$0xff] %v2128
        %2161 = vst [vmem:[%s239 + $0x158] sm:$0xff] %v2129
        %2162 = vst [vmem:[%s239 + $0x160] sm:$0xff] %v2130
        %2163 = vst [vmem:[%s239 + $0x168] sm:$0xff] %v2131
        %2164 = vst [vmem:[%s239 + $0x170] sm:$0xff] %v2132
        %2165 = vst [vmem:[%s239 + $0x178] sm:$0xff] %v2133
        %2166 = vst [vmem:[%s239 + $0x180] sm:$0xff] %v2134
        %2167 = vst [vmem:[%s239 + $0x188] sm:$0xff] %v2135
        %2168 = vst [vmem:[%s239 + $0x190] sm:$0xff] %v2136
        %2169 = vst [vmem:[%s239 + $0x198] sm:$0xff] %v2137
        %2170 = vst [vmem:[%s239 + $0x1a0] sm:$0xff] %v2138
        %2171 = vst [vmem:[%s239 + $0x1a8] sm:$0xff] %v2139
        %2172 = vst [vmem:[%s239 + $0x1b0] sm:$0xff] %v2140
        %2173 = vst [vmem:[%s239 + $0x1b8] sm:$0xff] %v2141
        %2174 = vst [vmem:[%s239 + $0x1c0] sm:$0xff] %v2142
        %2175 = vst [vmem:[%s239 + $0x1c8] sm:$0xff] %v2143
        %2176 = vst [vmem:[%s239 + $0x1d0] sm:$0xff] %v2144
        %2177 = vst [vmem:[%s239 + $0x1d8] sm:$0xff] %v2145
        %2178 = vst [vmem:[%s239 + $0x1e0] sm:$0xff] %v2146
        %2179 = vst [vmem:[%s239 + $0x1e8] sm:$0xff] %v2147
        %2180 = vst [vmem:[%s239 + $0x1f0] sm:$0xff] %v2148
        %2181 = vst [vmem:[%s239 + $0x1f8] sm:$0xff] %v2149
        %s2182 = sand.u32 %s144, 1
        %s2183 = scalar_lea.sflag [#allocation3], %s2182
        %s2184 = sand.u32 %s144, 1
        %s2185 = smul.addr %s2184, 512
        %s2186 = scalar_lea.vmem [#allocation2], %s2185
        // Predicated region
        $region37: #{tpu_custom_call.1} parent=35 // pred_check
          %p2187 = pneg %p154
        $region38: #{tpu_custom_call.1} parent=35 // pred_check_branch
          %2189 = sbr.rel (%p2187) target = $region40
        $region39: #{tpu_custom_call.1} parent=35 // pred_region
          %2191 = vsyncadd %s2183, 0
          %s2192 = smul.addr %s22, 64
          %s2193 = sadd.s32 %s23, %s2192
          %s2194 = smul.addr %s2193, 8
          %s2195 = scalar_lea.hbm %s4, %s2194
          %s2196 = sshll.u32 %s2186, 4
          %s2197 = int_to_ptr.vmem [resolvable:$true] %s2196
          %s2198 = sshll.u32 %s2195, 4
          %s2199 = int_to_ptr.hbm [resolvable:$true] %s2198
          %2204 = dma.vmem_to_hbm [thread:$0]  %s2197, 8192, %s2199, %s2183, 128, 128, 8
        $region40: #{tpu_custom_call.1} parent=35 // pred_fallthru
          _
      $region36: #{tpu_custom_call.1} parent=5 // pred_fallthru
        _
      %p2205 = scmp.le.s32.totalorder 2, %s13
      // Predicated region
      $region41: #{tpu_custom_call.1} parent=5 // pred_check
        %p2206 = pneg %p2205
      $region42: #{tpu_custom_call.1} parent=5 // pred_check_branch
        %2208 = sbr.rel (%p2206) target = $region44
      $region43: #{tpu_custom_call.1} parent=5 // pred_region
        %s2209 = ssub.s32 %s13, 2
        // Predicated region
        $region45: #{tpu_custom_call.1} parent=43 // pred_check
          %p2210 = pneg %p160
        $region46: #{tpu_custom_call.1} parent=43 // pred_check_branch
          %2212 = sbr.rel (%p2210) target = $region48
        $region47: #{tpu_custom_call.1} parent=43 // pred_region
          %s2213 = sand.u32 %s145, 1
          %s2214 = scalar_lea.sflag [#allocation3], %s2213
          %s2215 = sand.u32 %s145, 1
          %s2216 = smul.addr %s2215, 512
          %s2217 = scalar_lea.vmem [#allocation2], %s2216
          %2219 = dma.done %s2214, 8192
        $region48: #{tpu_custom_call.1} parent=43 // pred_fallthru
          _
      $region44: #{tpu_custom_call.1} parent=5 // pred_fallthru
        _
    $region6: #{tpu_custom_call.1} parent=1 // loop_footer
      %s17 = sadd.s32 1, %s13
    $region7: #{tpu_custom_call.1} parent=1 // loop_footer_branch
      %12 = sbr.rel target = $region3
    $region8: #{tpu_custom_call.1} parent=1 // loop_exit
      _
    %2220 = vsyncpa [#allocation3], 1
    %s2221 = scalar_lea.sflag [#allocation3], 1
    %2222 = vsyncpa %s2221, 1

</llo_original>
